<compile_context>
chip_gen: v6e
topology: v6e:2x2x1
jax: 0.10.0
libtpu: 0.0.40
codegen_flags: <defaults>
</compile_context>

<pallas_src>
import functools

import jax
import jax.numpy as jnp
from jax import lax
from jax.experimental import pallas as pl
from jax.experimental.pallas import tpu as pltpu


# ---------------------------------------------------------------------------
# Prologue kernel: per-position projections (cheap, O(B*L*E) work).
#   s  = relu(x @ s_w + s_b)
#   t  = relu(x @ t_w + t_b)
#   key[n] = s @ bw[n]                    (bi_linear, label-major layout)
#   su = s @ fc2_wu + fc2_b               (query half of fc2, bias folded)
#   tv = t @ fc2_wv                       (key half of fc2)
# ---------------------------------------------------------------------------
def _proj_kernel(x_ref, s_w_ref, s_b_ref, t_w_ref, t_b_ref, bw_ref,
                 w2u_ref, w2v_ref, b2_ref,
                 key_ref, t_out_ref, su_ref, tv_ref, *, num_labels):
    f32, bf16 = jnp.float32, jnp.bfloat16
    x = x_ref[0]                                                      # (TP, H) bf16
    s = jnp.maximum(
        jnp.dot(x, s_w_ref[...], preferred_element_type=f32) + s_b_ref[...], 0.0)
    t = jnp.maximum(
        jnp.dot(x, t_w_ref[...], preferred_element_type=f32) + t_b_ref[...], 0.0)
    s16 = s.astype(bf16)
    t16 = t.astype(bf16)
    t_out_ref[0] = t16
    su_ref[0] = (jnp.dot(s16, w2u_ref[...], preferred_element_type=f32)
                 + b2_ref[...]).astype(bf16)
    tv_ref[0] = jnp.dot(t16, w2v_ref[...], preferred_element_type=f32).astype(bf16)
    # Label-major key slabs: each store is a dense (TP, E) tile.
    for n in range(num_labels):
        key_ref[0, n] = jnp.dot(s16, bw_ref[n],
                                preferred_element_type=f32).astype(bf16)


# ---------------------------------------------------------------------------
# Main O(L^2) kernel: one (TI, NL, TJ) output block per grid step.
# ---------------------------------------------------------------------------
def _biaffine_block_kernel(key_ref, t_ref, su_ref, tv_ref, w3_ref, b3_ref,
                           out_ref, *, num_labels, ti, e_pad):
    f32 = jnp.float32
    t16 = t_ref[0]                                                    # (TJ, E) bf16
    su = su_ref[0]                                                    # (TI, E) bf16
    tv = tv_ref[0]                                                    # (TJ, E) bf16

    # ---- MLP term: h = relu(su_i + tv_j) in bf16, contracted against fc3.
    h = jnp.maximum(su[:, None, :] + tv[None, :, :], 0.0)            # (TI, TJ, E) bf16
    w3b = jnp.broadcast_to(w3_ref[...][None, :, :], (ti, num_labels, e_pad))
    dn_b = (((2,), (2,)), ((0,), (0,)))                               # contract e, batch i
    out2 = lax.dot_general(w3b, h, dn_b, preferred_element_type=f32)  # (TI, NL, TJ)
    out_ref[0] = out2 + b3_ref[...][None, :, :]

    # ---- biaffine term: NL dense (TI,E)x(E,TJ) MXU matmuls (t16 stationary,
    #      key rows stream) instead of an i-batched reload-bound dot_general.
    dn2 = (((1,), (1,)), ((), ()))                                    # contract e
    for n in range(num_labels):
        o1 = lax.dot_general(key_ref[0, n], t16, dn2,
                             preferred_element_type=f32)              # (TI, TJ)
        out_ref[0, :, n, :] += o1


def biaffine_layer3_forward(x, params):
    f32, bf16 = jnp.float32, jnp.bfloat16
    B, L, H = x.shape
    NL, E = params["fc3_w"].shape

    def ru(v, m):
        return (v + m - 1) // m * m

    # Pad every lane dimension to a multiple of 128 (layout plumbing only).
    H_p, E_p, L_p = ru(H, 128), ru(E, 128), ru(L, 128)

    TP = 128          # prologue positions per step
    TJ = 128          # key-side tile (lane dim of the output block)
    TI = 128          # query-side tile

    # Temporaries-aware VMEM estimate; shrink TI if a conservative 24 MiB
    # budget (well under v7x's 64 MiB physical VMEM) would be exceeded.
    def live_bytes(ti, tj):
        nl8 = ru(NL, 8)
        return (ti * tj * E_p * 2          # h (bf16)
                + ti * nl8 * tj * 4        # out2 value (f32, sublane-padded)
                + 2 * ti * nl8 * tj * 4    # double-buffered output block
                + 2 * NL * ti * E_p * 2    # double-buffered key block
                + 2 * 3 * tj * E_p * 2     # t / su / tv blocks
                + 2 * 1024 * 1024)         # weights + slack
    while TI > 8 and live_bytes(TI, TJ) > 24 * 1024 * 1024:
        TI //= 2

    def pad2(a, r, c):
        return jnp.pad(a, ((0, r - a.shape[0]), (0, c - a.shape[1])))

    # ---- parameter / input rearrangement (zero padding is exact for the
    # contraction dims; garbage in padded i/j rows is sliced off at the end).
    x_p = jnp.pad(x, ((0, 0), (0, L_p - L), (0, H_p - H))).astype(bf16)

    s_wk = pad2(params["s_w"].T, H_p, E_p).astype(bf16)               # (H, E)
    s_bk = pad2(params["s_b"].reshape(1, E), 1, E_p).astype(f32)
    t_wk = pad2(params["t_w"].T, H_p, E_p).astype(bf16)
    t_bk = pad2(params["t_b"].reshape(1, E), 1, E_p).astype(f32)

    # bi_linear weight (E*NL, E), out index o = e_out*NL + n.
    # bw_k[n, e_in, e_out] = bi_w[e_out*NL + n, e_in]
    bw_k = jnp.transpose(params["bi_w"].reshape(E, NL, E), (1, 2, 0))
    bw_k = jnp.pad(bw_k, ((0, 0), (0, E_p - E), (0, E_p - E))).astype(bf16)

    fc2_wu = pad2(params["fc2_w"][:, :E].T, E_p, E_p).astype(bf16)    # s-half
    fc2_wv = pad2(params["fc2_w"][:, E:].T, E_p, E_p).astype(bf16)    # t-half
    fc2_bk = pad2(params["fc2_b"].reshape(1, E), 1, E_p).astype(f32)
    fc3_wk = pad2(params["fc3_w"], NL, E_p).astype(bf16)              # (NL, E)
    fc3_bk = params["fc3_b"].reshape(NL, 1).astype(f32)

    def rep_p(shape):     # replicated input, prologue grid (b, p)
        return pl.BlockSpec(shape, lambda b, p, _n=len(shape): (0,) * _n)

    def rep_m(shape):     # replicated input, main grid (b, i, j)
        return pl.BlockSpec(shape, lambda b, i, j, _n=len(shape): (0,) * _n)

    # ---------------- prologue: per-position projections ----------------
    key_all, t_all, su_all, tv_all = pl.pallas_call(
        functools.partial(_proj_kernel, num_labels=NL),
        out_shape=(jax.ShapeDtypeStruct((B, NL, L_p, E_p), bf16),
                   jax.ShapeDtypeStruct((B, L_p, E_p), bf16),
                   jax.ShapeDtypeStruct((B, L_p, E_p), bf16),
                   jax.ShapeDtypeStruct((B, L_p, E_p), bf16)),
        grid=(B, L_p // TP),
        in_specs=[
            pl.BlockSpec((1, TP, H_p), lambda b, p: (b, p, 0)),
            rep_p((H_p, E_p)), rep_p((1, E_p)),                       # s_fc
            rep_p((H_p, E_p)), rep_p((1, E_p)),                       # t_fc
            rep_p((NL, E_p, E_p)),                                    # bi_linear
            rep_p((E_p, E_p)), rep_p((E_p, E_p)), rep_p((1, E_p)),    # fc2
        ],
        out_specs=(pl.BlockSpec((1, NL, TP, E_p), lambda b, p: (b, 0, p, 0)),
                   pl.BlockSpec((1, TP, E_p), lambda b, p: (b, p, 0)),
                   pl.BlockSpec((1, TP, E_p), lambda b, p: (b, p, 0)),
                   pl.BlockSpec((1, TP, E_p), lambda b, p: (b, p, 0))),
        compiler_params=pltpu.CompilerParams(
            dimension_semantics=("parallel", "parallel")),
    )(x_p, s_wk, s_bk, t_wk, t_bk, bw_k, fc2_wu, fc2_wv, fc2_bk)

    # ---------------- main O(L^2) kernel ----------------
    flops = 2 * B * L_p * L_p * NL * E_p * 2
    bytes_accessed = (2 * (key_all.size + t_all.size + su_all.size + tv_all.size)
                      + B * L_p * NL * L_p * 4)

    out_pad = pl.pallas_call(
        functools.partial(_biaffine_block_kernel,
                          num_labels=NL, ti=TI, e_pad=E_p),
        out_shape=jax.ShapeDtypeStruct((B, L_p, NL, L_p), f32),
        grid=(B, L_p // TI, L_p // TJ),
        in_specs=[
            pl.BlockSpec((1, NL, TI, E_p), lambda b, i, j: (b, 0, i, 0)),  # key
            pl.BlockSpec((1, TJ, E_p), lambda b, i, j: (b, j, 0)),         # t
            pl.BlockSpec((1, TI, E_p), lambda b, i, j: (b, i, 0)),         # su
            pl.BlockSpec((1, TJ, E_p), lambda b, i, j: (b, j, 0)),         # tv
            rep_m((NL, E_p)),                                              # fc3 w
            rep_m((NL, 1)),                                                # fc3 b
        ],
        out_specs=pl.BlockSpec((1, TI, NL, TJ), lambda b, i, j: (b, i, 0, j)),
        compiler_params=pltpu.CompilerParams(
            dimension_semantics=("parallel", "parallel", "parallel"),
            vmem_limit_bytes=48 * 1024 * 1024),
        cost_estimate=pl.CostEstimate(flops=flops, transcendentals=0,
                                      bytes_accessed=bytes_accessed),
    )(key_all, t_all, su_all, tv_all, fc3_wk, fc3_bk)

    return out_pad[:, :L, :, :L]


def init_params(key, input_size, hidden_size, num_labels):
    """Deterministic parameters with PyTorch nn.Linear shapes (weight = (out, in))."""
    ks = jax.random.split(key, 10)

    def linear(kw, kb, out_f, in_f):
        bound = 1.0 / (in_f ** 0.5)
        w = jax.random.uniform(kw, (out_f, in_f), jnp.float32, -bound, bound)
        b = jax.random.uniform(kb, (out_f,), jnp.float32, -bound, bound)
        return w, b

    s_w, s_b = linear(ks[0], ks[1], hidden_size, input_size)
    t_w, t_b = linear(ks[2], ks[3], hidden_size, input_size)
    fc2_w, fc2_b = linear(ks[4], ks[5], hidden_size, 2 * hidden_size)
    # init_weights(): fc3.weight.normal_(), bi_linear.weight.normal_(); biases untouched.
    fc3_w = jax.random.normal(ks[6], (num_labels, hidden_size), jnp.float32)
    _, fc3_b = linear(ks[7], ks[8], num_labels, hidden_size)
    bi_w = jax.random.normal(ks[9], (hidden_size * num_labels, hidden_size), jnp.float32)
    return dict(s_w=s_w, s_b=s_b, t_w=t_w, t_b=t_b,
                fc2_w=fc2_w, fc2_b=fc2_b, fc3_w=fc3_w, fc3_b=fc3_b, bi_w=bi_w)


def reference_forward(x, params):
    """Pure-JAX mirror of the PyTorch forward (for validation)."""
    B, L, H = x.shape
    NL, E = params["fc3_w"].shape
    s = jax.nn.relu(jnp.einsum('blh,eh->ble', x, params["s_w"]) + params["s_b"])
    t = jax.nn.relu(jnp.einsum('blh,eh->ble', x, params["t_w"]) + params["t_b"])
    key = jnp.einsum('ble,oe->blo', s, params["bi_w"])            # (B, L, E*NL)
    key = key.reshape(B, L, E, NL).transpose(0, 3, 1, 2)          # (B, NL, L, E)
    value = t[:, None].transpose(0, 1, 3, 2)                      # (B, 1, E, L)
    out1 = jnp.matmul(key, value)                                 # (B, NL, L, L)
    out1 = out1.transpose(0, 2, 1, 3)                             # (B, L, NL, L)
    u = jnp.broadcast_to(s[:, :, None, :], (B, L, L, E))
    v = jnp.broadcast_to(t[:, None, :, :], (B, L, L, E))
    uv = jnp.concatenate([u, v], axis=-1)
    h = jax.nn.relu(jnp.einsum('bije,oe->bijo', uv, params["fc2_w"]) + params["fc2_b"])
    o2 = jnp.einsum('bije,oe->bijo', h, params["fc3_w"]) + params["fc3_b"]
    o2 = o2.transpose(0, 1, 3, 2)                                 # (B, L, NL, L)
    return out1 + o2


if __name__ == "__main__":
    B, L, H, E, NL = 2, 8, 32, 32, 4   # batch, seq, input_size, hidden_size, num_labels
    root = jax.random.PRNGKey(0)
    kx, kp = jax.random.split(root)
    x = jax.random.normal(kx, (B, L, H), jnp.float32)
    params = init_params(kp, H, E, NL)

    out = jax.block_until_ready(biaffine_layer3_forward(x, params))
    ref = jax.block_until_ready(reference_forward(x, params))

    assert out.shape == (B, L, NL, L), out.shape
    scale = float(jnp.max(jnp.abs(ref))) + 1e-6
    max_err = float(jnp.max(jnp.abs(out - ref)))
    # bf16 MXU operands / bf16 h with f32 accumulation -> slightly looser tolerance.
    assert max_err / scale < 3e-2, f"mismatch: max_err={max_err}, scale={scale}"
    print("KERNEL_OK")
</pallas_src>

<mosaic_0001>
module attributes {stable_mosaic.version = 11 : i64} {
  func.func @_proj_kernel(%arg0: i32, %arg1: i32, %arg2: memref<1x128x128xbf16, #tpu.memory_space<vmem>>, %arg3: memref<128x128xbf16, #tpu.memory_space<vmem>>, %arg4: memref<1x128xf32, #tpu.memory_space<vmem>>, %arg5: memref<128x128xbf16, #tpu.memory_space<vmem>>, %arg6: memref<1x128xf32, #tpu.memory_space<vmem>>, %arg7: memref<4x128x128xbf16, #tpu.memory_space<vmem>>, %arg8: memref<128x128xbf16, #tpu.memory_space<vmem>>, %arg9: memref<128x128xbf16, #tpu.memory_space<vmem>>, %arg10: memref<1x128xf32, #tpu.memory_space<vmem>>, %arg11: memref<1x4x128x128xbf16, #tpu.memory_space<vmem>>, %arg12: memref<1x128x128xbf16, #tpu.memory_space<vmem>>, %arg13: memref<1x128x128xbf16, #tpu.memory_space<vmem>>, %arg14: memref<1x128x128xbf16, #tpu.memory_space<vmem>>) attributes {dimension_semantics = [#tpu.dimension_semantics<parallel>, #tpu.dimension_semantics<parallel>], iteration_bounds = array<i64: 2, 1>, scalar_prefetch = 0 : i64, scratch_operands = 0 : i64, tpu.core_type = #tpu.core_type<tc>, window_params = [{transform_indices = @transform_0, window_bounds = array<i64: 1, 128, 128>}, {pipeline_mode = #tpu.pipeline_mode<synchronous>, transform_indices = @transform_1, window_bounds = array<i64: 128, 128>}, {pipeline_mode = #tpu.pipeline_mode<synchronous>, transform_indices = @transform_2, window_bounds = array<i64: 1, 128>}, {pipeline_mode = #tpu.pipeline_mode<synchronous>, transform_indices = @transform_3, window_bounds = array<i64: 128, 128>}, {pipeline_mode = #tpu.pipeline_mode<synchronous>, transform_indices = @transform_4, window_bounds = array<i64: 1, 128>}, {pipeline_mode = #tpu.pipeline_mode<synchronous>, transform_indices = @transform_5, window_bounds = array<i64: 4, 128, 128>}, {pipeline_mode = #tpu.pipeline_mode<synchronous>, transform_indices = @transform_6, window_bounds = array<i64: 128, 128>}, {pipeline_mode = #tpu.pipeline_mode<synchronous>, transform_indices = @transform_7, window_bounds = array<i64: 128, 128>}, {pipeline_mode = #tpu.pipeline_mode<synchronous>, transform_indices = @transform_8, window_bounds = array<i64: 1, 128>}, {transform_indices = @transform_9, window_bounds = array<i64: 1, 4, 128, 128>}, {transform_indices = @transform_10, window_bounds = array<i64: 1, 128, 128>}, {transform_indices = @transform_11, window_bounds = array<i64: 1, 128, 128>}, {transform_indices = @transform_12, window_bounds = array<i64: 1, 128, 128>}]} {
    %c0 = arith.constant 0 : index
    %c0_0 = arith.constant 0 : index
    %c0_1 = arith.constant 0 : index
    %0 = vector.load %arg2[%c0, %c0_0, %c0_1] : memref<1x128x128xbf16, #tpu.memory_space<vmem>>, vector<1x128x128xbf16>
    %1 = vector.shape_cast %0 : vector<1x128x128xbf16> to vector<128x128xbf16>
    %c0_2 = arith.constant 0 : index
    %c0_3 = arith.constant 0 : index
    %2 = vector.load %arg3[%c0_2, %c0_3] : memref<128x128xbf16, #tpu.memory_space<vmem>>, vector<128x128xbf16>
    %cst = arith.constant dense<0.000000e+00> : vector<128x128xf32>
    %3 = tpu.matmul %1, %2, %cst {dimension_numbers = #tpu.dot_dimension_numbers<[1], [0], [0], [1], [0, 0, 1, 1], [], []>} : vector<128x128xbf16>, vector<128x128xbf16>, vector<128x128xf32> -> vector<128x128xf32>
    %c0_4 = arith.constant 0 : index
    %c0_5 = arith.constant 0 : index
    %4 = vector.load %arg4[%c0_4, %c0_5] : memref<1x128xf32, #tpu.memory_space<vmem>>, vector<1x128xf32>
    %5 = vector.broadcast %4 : vector<1x128xf32> to vector<128x128xf32>
    %6 = arith.addf %3, %5 : vector<128x128xf32>
    %cst_6 = arith.constant 0.000000e+00 : f32
    %7 = vector.broadcast %cst_6 : f32 to vector<128x128xf32>
    %8 = arith.maximumf %6, %7 : vector<128x128xf32>
    %c0_7 = arith.constant 0 : index
    %c0_8 = arith.constant 0 : index
    %9 = vector.load %arg5[%c0_7, %c0_8] : memref<128x128xbf16, #tpu.memory_space<vmem>>, vector<128x128xbf16>
    %cst_9 = arith.constant dense<0.000000e+00> : vector<128x128xf32>
    %10 = tpu.matmul %1, %9, %cst_9 {dimension_numbers = #tpu.dot_dimension_numbers<[1], [0], [0], [1], [0, 0, 1, 1], [], []>} : vector<128x128xbf16>, vector<128x128xbf16>, vector<128x128xf32> -> vector<128x128xf32>
    %c0_10 = arith.constant 0 : index
    %c0_11 = arith.constant 0 : index
    %11 = vector.load %arg6[%c0_10, %c0_11] : memref<1x128xf32, #tpu.memory_space<vmem>>, vector<1x128xf32>
    %12 = vector.broadcast %11 : vector<1x128xf32> to vector<128x128xf32>
    %13 = arith.addf %10, %12 : vector<128x128xf32>
    %cst_12 = arith.constant 0.000000e+00 : f32
    %14 = vector.broadcast %cst_12 : f32 to vector<128x128xf32>
    %15 = arith.maximumf %13, %14 : vector<128x128xf32>
    %16 = arith.truncf %8 : vector<128x128xf32> to vector<128x128xbf16>
    %17 = arith.truncf %15 : vector<128x128xf32> to vector<128x128xbf16>
    %c0_13 = arith.constant 0 : index
    %c0_14 = arith.constant 0 : index
    %c0_15 = arith.constant 0 : index
    %18 = vector.load %arg12[%c0_13, %c0_14, %c0_15] : memref<1x128x128xbf16, #tpu.memory_space<vmem>>, vector<1x128x128xbf16>
    %19 = vector.shape_cast %18 : vector<1x128x128xbf16> to vector<128x128xbf16>
    %20 = vector.shape_cast %17 : vector<128x128xbf16> to vector<1x128x128xbf16>
    tpu.vector_store %arg12[%c0_13, %c0_14, %c0_15], %20 {strides = array<i32>} : memref<1x128x128xbf16, #tpu.memory_space<vmem>>, vector<1x128x128xbf16>,
    %c0_16 = arith.constant 0 : index
    %c0_17 = arith.constant 0 : index
    %21 = vector.load %arg8[%c0_16, %c0_17] : memref<128x128xbf16, #tpu.memory_space<vmem>>, vector<128x128xbf16>
    %cst_18 = arith.constant dense<0.000000e+00> : vector<128x128xf32>
    %22 = tpu.matmul %16, %21, %cst_18 {dimension_numbers = #tpu.dot_dimension_numbers<[1], [0], [0], [1], [0, 0, 1, 1], [], []>} : vector<128x128xbf16>, vector<128x128xbf16>, vector<128x128xf32> -> vector<128x128xf32>
    %c0_19 = arith.constant 0 : index
    %c0_20 = arith.constant 0 : index
    %23 = vector.load %arg10[%c0_19, %c0_20] : memref<1x128xf32, #tpu.memory_space<vmem>>, vector<1x128xf32>
    %24 = vector.broadcast %23 : vector<1x128xf32> to vector<128x128xf32>
    %25 = arith.addf %22, %24 : vector<128x128xf32>
    %26 = arith.truncf %25 : vector<128x128xf32> to vector<128x128xbf16>
    %c0_21 = arith.constant 0 : index
    %c0_22 = arith.constant 0 : index
    %c0_23 = arith.constant 0 : index
    %27 = vector.load %arg13[%c0_21, %c0_22, %c0_23] : memref<1x128x128xbf16, #tpu.memory_space<vmem>>, vector<1x128x128xbf16>
    %28 = vector.shape_cast %27 : vector<1x128x128xbf16> to vector<128x128xbf16>
    %29 = vector.shape_cast %26 : vector<128x128xbf16> to vector<1x128x128xbf16>
    tpu.vector_store %arg13[%c0_21, %c0_22, %c0_23], %29 {strides = array<i32>} : memref<1x128x128xbf16, #tpu.memory_space<vmem>>, vector<1x128x128xbf16>,
    %c0_24 = arith.constant 0 : index
    %c0_25 = arith.constant 0 : index
    %30 = vector.load %arg9[%c0_24, %c0_25] : memref<128x128xbf16, #tpu.memory_space<vmem>>, vector<128x128xbf16>
    %cst_26 = arith.constant dense<0.000000e+00> : vector<128x128xf32>
    %31 = tpu.matmul %17, %30, %cst_26 {dimension_numbers = #tpu.dot_dimension_numbers<[1], [0], [0], [1], [0, 0, 1, 1], [], []>} : vector<128x128xbf16>, vector<128x128xbf16>, vector<128x128xf32> -> vector<128x128xf32>
    %32 = arith.truncf %31 : vector<128x128xf32> to vector<128x128xbf16>
    %c0_27 = arith.constant 0 : index
    %c0_28 = arith.constant 0 : index
    %c0_29 = arith.constant 0 : index
    %33 = vector.load %arg14[%c0_27, %c0_28, %c0_29] : memref<1x128x128xbf16, #tpu.memory_space<vmem>>, vector<1x128x128xbf16>
    %34 = vector.shape_cast %33 : vector<1x128x128xbf16> to vector<128x128xbf16>
    %35 = vector.shape_cast %32 : vector<128x128xbf16> to vector<1x128x128xbf16>
    tpu.vector_store %arg14[%c0_27, %c0_28, %c0_29], %35 {strides = array<i32>} : memref<1x128x128xbf16, #tpu.memory_space<vmem>>, vector<1x128x128xbf16>,
    %c0_30 = arith.constant 0 : index
    %c0_31 = arith.constant 0 : index
    %c0_32 = arith.constant 0 : index
    %36 = vector.load %arg7[%c0_30, %c0_31, %c0_32] : memref<4x128x128xbf16, #tpu.memory_space<vmem>>, vector<1x128x128xbf16>
    %37 = vector.shape_cast %36 : vector<1x128x128xbf16> to vector<128x128xbf16>
    %cst_33 = arith.constant dense<0.000000e+00> : vector<128x128xf32>
    %38 = tpu.matmul %16, %37, %cst_33 {dimension_numbers = #tpu.dot_dimension_numbers<[1], [0], [0], [1], [0, 0, 1, 1], [], []>} : vector<128x128xbf16>, vector<128x128xbf16>, vector<128x128xf32> -> vector<128x128xf32>
    %39 = arith.truncf %38 : vector<128x128xf32> to vector<128x128xbf16>
    %c0_34 = arith.constant 0 : index
    %c0_35 = arith.constant 0 : index
    %c0_36 = arith.constant 0 : index
    %c0_37 = arith.constant 0 : index
    %40 = vector.load %arg11[%c0_34, %c0_35, %c0_36, %c0_37] : memref<1x4x128x128xbf16, #tpu.memory_space<vmem>>, vector<1x1x128x128xbf16>
    %41 = vector.shape_cast %40 : vector<1x1x128x128xbf16> to vector<128x128xbf16>
    %42 = vector.shape_cast %39 : vector<128x128xbf16> to vector<1x1x128x128xbf16>
    tpu.vector_store %arg11[%c0_34, %c0_35, %c0_36, %c0_37], %42 {strides = array<i32>} : memref<1x4x128x128xbf16, #tpu.memory_space<vmem>>, vector<1x1x128x128xbf16>,
    %c1 = arith.constant 1 : index
    %c0_38 = arith.constant 0 : index
    %c0_39 = arith.constant 0 : index
    %43 = vector.load %arg7[%c1, %c0_38, %c0_39] : memref<4x128x128xbf16, #tpu.memory_space<vmem>>, vector<1x128x128xbf16>
    %44 = vector.shape_cast %43 : vector<1x128x128xbf16> to vector<128x128xbf16>
    %cst_40 = arith.constant dense<0.000000e+00> : vector<128x128xf32>
    %45 = tpu.matmul %16, %44, %cst_40 {dimension_numbers = #tpu.dot_dimension_numbers<[1], [0], [0], [1], [0, 0, 1, 1], [], []>} : vector<128x128xbf16>, vector<128x128xbf16>, vector<128x128xf32> -> vector<128x128xf32>
    %46 = arith.truncf %45 : vector<128x128xf32> to vector<128x128xbf16>
    %c0_41 = arith.constant 0 : index
    %c1_42 = arith.constant 1 : index
    %c0_43 = arith.constant 0 : index
    %c0_44 = arith.constant 0 : index
    %47 = vector.load %arg11[%c0_41, %c1_42, %c0_43, %c0_44] : memref<1x4x128x128xbf16, #tpu.memory_space<vmem>>, vector<1x1x128x128xbf16>
    %48 = vector.shape_cast %47 : vector<1x1x128x128xbf16> to vector<128x128xbf16>
    %49 = vector.shape_cast %46 : vector<128x128xbf16> to vector<1x1x128x128xbf16>
    tpu.vector_store %arg11[%c0_41, %c1_42, %c0_43, %c0_44], %49 {strides = array<i32>} : memref<1x4x128x128xbf16, #tpu.memory_space<vmem>>, vector<1x1x128x128xbf16>,
    %c2 = arith.constant 2 : index
    %c0_45 = arith.constant 0 : index
    %c0_46 = arith.constant 0 : index
    %50 = vector.load %arg7[%c2, %c0_45, %c0_46] : memref<4x128x128xbf16, #tpu.memory_space<vmem>>, vector<1x128x128xbf16>
    %51 = vector.shape_cast %50 : vector<1x128x128xbf16> to vector<128x128xbf16>
    %cst_47 = arith.constant dense<0.000000e+00> : vector<128x128xf32>
    %52 = tpu.matmul %16, %51, %cst_47 {dimension_numbers = #tpu.dot_dimension_numbers<[1], [0], [0], [1], [0, 0, 1, 1], [], []>} : vector<128x128xbf16>, vector<128x128xbf16>, vector<128x128xf32> -> vector<128x128xf32>
    %53 = arith.truncf %52 : vector<128x128xf32> to vector<128x128xbf16>
    %c0_48 = arith.constant 0 : index
    %c2_49 = arith.constant 2 : index
    %c0_50 = arith.constant 0 : index
    %c0_51 = arith.constant 0 : index
    %54 = vector.load %arg11[%c0_48, %c2_49, %c0_50, %c0_51] : memref<1x4x128x128xbf16, #tpu.memory_space<vmem>>, vector<1x1x128x128xbf16>
    %55 = vector.shape_cast %54 : vector<1x1x128x128xbf16> to vector<128x128xbf16>
    %56 = vector.shape_cast %53 : vector<128x128xbf16> to vector<1x1x128x128xbf16>
    tpu.vector_store %arg11[%c0_48, %c2_49, %c0_50, %c0_51], %56 {strides = array<i32>} : memref<1x4x128x128xbf16, #tpu.memory_space<vmem>>, vector<1x1x128x128xbf16>,
    %c3 = arith.constant 3 : index
    %c0_52 = arith.constant 0 : index
    %c0_53 = arith.constant 0 : index
    %57 = vector.load %arg7[%c3, %c0_52, %c0_53] : memref<4x128x128xbf16, #tpu.memory_space<vmem>>, vector<1x128x128xbf16>
    %58 = vector.shape_cast %57 : vector<1x128x128xbf16> to vector<128x128xbf16>
    %cst_54 = arith.constant dense<0.000000e+00> : vector<128x128xf32>
    %59 = tpu.matmul %16, %58, %cst_54 {dimension_numbers = #tpu.dot_dimension_numbers<[1], [0], [0], [1], [0, 0, 1, 1], [], []>} : vector<128x128xbf16>, vector<128x128xbf16>, vector<128x128xf32> -> vector<128x128xf32>
    %60 = arith.truncf %59 : vector<128x128xf32> to vector<128x128xbf16>
    %c0_55 = arith.constant 0 : index
    %c3_56 = arith.constant 3 : index
    %c0_57 = arith.constant 0 : index
    %c0_58 = arith.constant 0 : index
    %61 = vector.load %arg11[%c0_55, %c3_56, %c0_57, %c0_58] : memref<1x4x128x128xbf16, #tpu.memory_space<vmem>>, vector<1x1x128x128xbf16>
    %62 = vector.shape_cast %61 : vector<1x1x128x128xbf16> to vector<128x128xbf16>
    %63 = vector.shape_cast %60 : vector<128x128xbf16> to vector<1x1x128x128xbf16>
    tpu.vector_store %arg11[%c0_55, %c3_56, %c0_57, %c0_58], %63 {strides = array<i32>} : memref<1x4x128x128xbf16, #tpu.memory_space<vmem>>, vector<1x1x128x128xbf16>,
    return
  }
  func.func @transform_0(%arg0: i32, %arg1: i32) -> (i32, i32, i32) {
    %c0_i32 = arith.constant 0 : i32
    %c0_i32_0 = arith.constant 0 : i32
    return %arg0, %arg1, %c0_i32 : i32, i32, i32
  }
  func.func @transform_1(%arg0: i32, %arg1: i32) -> (i32, i32) {
    %c0_i32 = arith.constant 0 : i32
    %c0_i32_0 = arith.constant 0 : i32
    %c0_i32_1 = arith.constant 0 : i32
    return %c0_i32, %c0_i32_0 : i32, i32
  }
  func.func @transform_2(%arg0: i32, %arg1: i32) -> (i32, i32) {
    %c0_i32 = arith.constant 0 : i32
    %c0_i32_0 = arith.constant 0 : i32
    %c0_i32_1 = arith.constant 0 : i32
    return %c0_i32, %c0_i32_0 : i32, i32
  }
  func.func @transform_3(%arg0: i32, %arg1: i32) -> (i32, i32) {
    %c0_i32 = arith.constant 0 : i32
    %c0_i32_0 = arith.constant 0 : i32
    %c0_i32_1 = arith.constant 0 : i32
    return %c0_i32, %c0_i32_0 : i32, i32
  }
  func.func @transform_4(%arg0: i32, %arg1: i32) -> (i32, i32) {
    %c0_i32 = arith.constant 0 : i32
    %c0_i32_0 = arith.constant 0 : i32
    %c0_i32_1 = arith.constant 0 : i32
    return %c0_i32, %c0_i32_0 : i32, i32
  }
  func.func @transform_5(%arg0: i32, %arg1: i32) -> (i32, i32, i32) {
    %c0_i32 = arith.constant 0 : i32
    %c0_i32_0 = arith.constant 0 : i32
    %c0_i32_1 = arith.constant 0 : i32
    %c0_i32_2 = arith.constant 0 : i32
    return %c0_i32, %c0_i32_0, %c0_i32_1 : i32, i32, i32
  }
  func.func @transform_6(%arg0: i32, %arg1: i32) -> (i32, i32) {
    %c0_i32 = arith.constant 0 : i32
    %c0_i32_0 = arith.constant 0 : i32
    %c0_i32_1 = arith.constant 0 : i32
    return %c0_i32, %c0_i32_0 : i32, i32
  }
  func.func @transform_7(%arg0: i32, %arg1: i32) -> (i32, i32) {
    %c0_i32 = arith.constant 0 : i32
    %c0_i32_0 = arith.constant 0 : i32
    %c0_i32_1 = arith.constant 0 : i32
    return %c0_i32, %c0_i32_0 : i32, i32
  }
  func.func @transform_8(%arg0: i32, %arg1: i32) -> (i32, i32) {
    %c0_i32 = arith.constant 0 : i32
    %c0_i32_0 = arith.constant 0 : i32
    %c0_i32_1 = arith.constant 0 : i32
    return %c0_i32, %c0_i32_0 : i32, i32
  }
  func.func @transform_9(%arg0: i32, %arg1: i32) -> (i32, i32, i32, i32) {
    %c0_i32 = arith.constant 0 : i32
    %c0_i32_0 = arith.constant 0 : i32
    %c0_i32_1 = arith.constant 0 : i32
    return %arg0, %c0_i32, %arg1, %c0_i32_0 : i32, i32, i32, i32
  }
  func.func @transform_10(%arg0: i32, %arg1: i32) -> (i32, i32, i32) {
    %c0_i32 = arith.constant 0 : i32
    %c0_i32_0 = arith.constant 0 : i32
    return %arg0, %arg1, %c0_i32 : i32, i32, i32
  }
  func.func @transform_11(%arg0: i32, %arg1: i32) -> (i32, i32, i32) {
    %c0_i32 = arith.constant 0 : i32
    %c0_i32_0 = arith.constant 0 : i32
    return %arg0, %arg1, %c0_i32 : i32, i32, i32
  }
  func.func @transform_12(%arg0: i32, %arg1: i32) -> (i32, i32, i32) {
    %c0_i32 = arith.constant 0 : i32
    %c0_i32_0 = arith.constant 0 : i32
    return %arg0, %arg1, %c0_i32 : i32, i32, i32
  }
}

</mosaic_0001>

<llo_original>
// kernel: tpu_custom_call.1
$region0: #{tpu_custom_call.1}
  #allocation0 [shape = 'u32[]', space=smem, size = 0x4, offset = 0x4, fixed_abs, tag = 'smem constant byte address 0x4 - core index']
  #allocation1 [shape = 'u32[144,128]{1,0:T(1,128)}', space=vmem, size = 0x12000, scoped, tag = 'internal scratch']
  %s0 = inlined_call_operand.hbm [shape: bf16[2,128,128], index: 0, kind: input, shape index: {}]
  %s1 = inlined_call_operand.hbm [shape: bf16[128,128], index: 1, kind: input, shape index: {}]
  %s2 = inlined_call_operand.vmem [shape: f32[1,128], index: 2, kind: input, shape index: {}]
  %s3 = inlined_call_operand.hbm [shape: bf16[128,128], index: 3, kind: input, shape index: {}]
  %s4 = inlined_call_operand.vmem [shape: f32[1,128], index: 4, kind: input, shape index: {}]
  %s5 = inlined_call_operand.hbm [shape: bf16[4,128,128], index: 5, kind: input, shape index: {}]
  %s6 = inlined_call_operand.hbm [shape: bf16[128,128], index: 6, kind: input, shape index: {}]
  %s7 = inlined_call_operand.hbm [shape: bf16[128,128], index: 7, kind: input, shape index: {}]
  %s8 = inlined_call_operand.vmem [shape: f32[1,128], index: 8, kind: input, shape index: {}]
  %s9 = inlined_call_operand.hbm [shape: bf16[2,4,128,128], index: 9, kind: output, shape index: {0}]
  %s10 = inlined_call_operand.hbm [shape: bf16[2,128,128], index: 10, kind: output, shape index: {1}]
  %s11 = inlined_call_operand.hbm [shape: bf16[2,128,128], index: 11, kind: output, shape index: {2}]
  %s12 = inlined_call_operand.hbm [shape: bf16[2,128,128], index: 12, kind: output, shape index: {3}]
  %13 = xla_tuple %s9, %s10, %s11, %s12
  %s14 = sld [smem:[#allocation0]]
  $region117: #{tpu_custom_call.1} parent=0
    _
  %s16 = ssub.s32 1, %s14
  %s17 = scalar_select 0, %s16, %s14
  $region1: #{tpu_custom_call.1} parent=0
    #allocation2 [shape = 'u8[65536]{0}', space=vmem, size = 0x10000, scoped, tag = 'input window, operand 0']
    #allocation3 [shape = 's32[2]{0}', space=sflag, size = 0x8, scoped, tag = 'scoped memory for tpu_custom_call.1']
    #allocation4 [shape = 's32[2]{0}', space=sflag, size = 0x8, scoped, tag = 'scoped memory for tpu_custom_call.1']
    #allocation5 [shape = 'u8[32768]{0}', space=vmem, size = 0x8000, scoped, tag = 'input window, operand 1, single buffered']
    #allocation6 [shape = 's32[1]{0}', space=sflag, size = 0x4, scoped, tag = 'scoped memory for tpu_custom_call.1']
    #allocation7 [shape = 'u8[32768]{0}', space=vmem, size = 0x8000, scoped, tag = 'input window, operand 3, single buffered']
    #allocation8 [shape = 'u8[131072]{0}', space=vmem, size = 0x20000, scoped, tag = 'input window, operand 5, single buffered']
    #allocation9 [shape = 's32[1]{0}', space=sflag, size = 0x4, scoped, tag = 'scoped memory for tpu_custom_call.1']
    #allocation10 [shape = 'u8[32768]{0}', space=vmem, size = 0x8000, scoped, tag = 'input window, operand 6, single buffered']
    #allocation11 [shape = 'u8[32768]{0}', space=vmem, size = 0x8000, scoped, tag = 'input window, operand 7, single buffered']
    #allocation12 [shape = 's32[1]{0}', space=sflag, size = 0x4, scoped, tag = 'scoped memory for tpu_custom_call.1']
    #allocation13 [shape = 'u8[262144]{0}', space=vmem, size = 0x40000, scoped, tag = 'output window, operand 0']
    #allocation14 [shape = 'u8[65536]{0}', space=vmem, size = 0x10000, scoped, tag = 'output window, operand 1']
    #allocation15 [shape = 's32[2]{0}', space=sflag, size = 0x8, scoped, tag = 'scoped memory for tpu_custom_call.1']
    #allocation16 [shape = 'u8[65536]{0}', space=vmem, size = 0x10000, scoped, tag = 'output window, operand 2']
    #allocation17 [shape = 'u8[65536]{0}', space=vmem, size = 0x10000, scoped, tag = 'output window, operand 3']
    #allocation18 [shape = 's32[2]{0}', space=sflag, size = 0x8, scoped, tag = 'scoped memory for tpu_custom_call.1']
    %18 = vsyncpa [#allocation3], 0
    %s19 = scalar_lea.sflag [#allocation3], 1
    %20 = vsyncpa %s19, 0
    %21 = vsyncpa [#allocation6], 0
    %22 = vsyncpa [#allocation9], 0
    %23 = vsyncpa [#allocation12], 0
    %24 = vsyncpa [#allocation4], 0
    %s25 = scalar_lea.sflag [#allocation4], 1
    %26 = vsyncpa %s25, 0
    %27 = vsyncpa [#allocation15], 0
    %s28 = scalar_lea.sflag [#allocation15], 1
    %29 = vsyncpa %s28, 0
    %30 = vsyncpa [#allocation18], 0
    %s31 = scalar_lea.sflag [#allocation18], 1
    %32 = vsyncpa %s31, 0
    loop: start=0, step=1, limit=4
    $region2: #{tpu_custom_call.1} parent=1 // loop_pre_header
      _
    $region3: #{tpu_custom_call.1} parent=1 // loop_header
      %s34 = sphi 0, %s38
      %p35 = scmp.ge.s32.totalorder %s34, 4
      %s41 = sphi 0, %s53
      %s42 = sphi 0, %s49
      %s43 = sphi 0, %s41
      %s44 = sphi 0, %s42
      %s45 = sphi 0, %s43
      %s46 = sphi 0, %s44
      %s58 = sphi 0, %s60
      %s61 = sphi 0, %s58
      %s62 = sphi 0, %s61
      %s78 = sphi 0, %s62
      %s82 = sphi 0, %s82
      %s84 = sphi 0, %s82
      %s85 = sphi 0, %s84
      %s99 = sphi 0, %s85
      %s103 = sphi 0, %s103
      %s105 = sphi 0, %s103
      %s106 = sphi 0, %s105
      %s120 = sphi 0, %s106
      %s124 = sphi 0, %s124
      %s126 = sphi 0, %s124
      %s127 = sphi 0, %s126
      %s141 = sphi 0, %s127
      %s145 = sphi 0, %s145
      %s147 = sphi 0, %s145
      %s148 = sphi 0, %s147
      %s162 = sphi 0, %s148
      %s166 = sphi 0, %s166
      %s168 = sphi 0, %s166
      %s169 = sphi 0, %s168
      %s183 = sphi 0, %s169
      %s187 = sphi 0, %s187
      %s189 = sphi 0, %s187
      %s190 = sphi 0, %s189
      %s204 = sphi 0, %s190
      %s208 = sphi 0, %s208
      %s210 = sphi 0, %s208
      %s211 = sphi 0, %s210
      %s225 = sphi 0, %s211
      %s229 = sphi 0, %s229
      %s231 = sphi 0, %s229
      %s232 = sphi 0, %s231
      %s246 = sphi 0, %s232
      %s254 = sphi 0, %s256
      %s257 = sphi 0, %s254
      %s258 = sphi 0, %s257
      %s274 = sphi 0, %s258
      %s282 = sphi 0, %s284
      %s285 = sphi 0, %s282
      %s286 = sphi 0, %s285
      %s302 = sphi 0, %s286
      %s310 = sphi 0, %s312
      %s313 = sphi 0, %s310
      %s314 = sphi 0, %s313
      %s330 = sphi 0, %s314
      %s338 = sphi 0, %s340
      %s341 = sphi 0, %s338
      %s342 = sphi 0, %s341
      %s358 = sphi 0, %s342
    $region4: #{tpu_custom_call.1} parent=1 // loop_header_branch
      %37 = sbr.rel (%p35) target = $region8
    $region5: #{tpu_custom_call.1} parent=1 // loop_body
      %s39 = ssub.s32 %s34, 1
      %s40 = ssub.s32 %s34, 2
      %s47 = sadd.s32 1, %s42
      %p48 = scmp.ge.s32.totalorder %s47, 1
      %s49 = scalar_select %p48, 0, %s47
      %s50 = sadd.s32 1, %s41
      %s51 = scalar_select %p48, %s50, %s41
      %p52 = scmp.ge.s32.totalorder %s51, 2
      %s53 = scalar_select %p52, 0, %s51
      %s54 = ssub.s32 %s41, %s53
      %s55 = ssub.s32 %s42, %s49
      %s56 = sor.u32 %s54, %s55
      %p57 = scmp.eq.s32.totalorder %s56, 0
      %s59 = sadd.s32 %s58, 1
      %s60 = scalar_select %p57, %s58, %s59
      %p63 = pneg %p57
      %p64 = scmp.eq.s32.totalorder %s34, 1
      %p65 = por %p63, %p64
      %p66 = scmp.ne.s32.totalorder %s58, %s61
      %p67 = scmp.eq.s32.totalorder %s34, 0
      %p68 = por %p66, %p67
      %p69 = scmp.ne.s32.totalorder %s58, %s61
      %p70 = scmp.eq.s32.totalorder %s39, 1
      %p71 = por %p69, %p70
      %p72 = scmp.ne.s32.totalorder %s61, %s62
      %p73 = scmp.eq.s32.totalorder %s39, 0
      %p74 = por %p72, %p73
      %p75 = scmp.ne.s32.totalorder %s61, %s62
      %p76 = scmp.eq.s32.totalorder %s40, 1
      %p77 = por %p75, %p76
      %p79 = scmp.ne.s32.totalorder %s62, %s78
      %p80 = scmp.eq.s32.totalorder %s40, 0
      %p81 = por %p79, %p80
      %s83 = sadd.s32 %s82, 1
      %p86 = scmp.eq.s32.totalorder %s34, 1
      %p87 = scmp.ne.s32.totalorder %s82, %s84
      %p88 = scmp.eq.s32.totalorder %s34, 0
      %p89 = por %p87, %p88
      %p90 = scmp.ne.s32.totalorder %s82, %s84
      %p91 = scmp.eq.s32.totalorder %s39, 1
      %p92 = por %p90, %p91
      %p93 = scmp.ne.s32.totalorder %s84, %s85
      %p94 = scmp.eq.s32.totalorder %s39, 0
      %p95 = por %p93, %p94
      %p96 = scmp.ne.s32.totalorder %s84, %s85
      %p97 = scmp.eq.s32.totalorder %s40, 1
      %p98 = por %p96, %p97
      %p100 = scmp.ne.s32.totalorder %s85, %s99
      %p101 = scmp.eq.s32.totalorder %s40, 0
      %p102 = por %p100, %p101
      %s104 = sadd.s32 %s103, 1
      %p107 = scmp.eq.s32.totalorder %s34, 1
      %p108 = scmp.ne.s32.totalorder %s103, %s105
      %p109 = scmp.eq.s32.totalorder %s34, 0
      %p110 = por %p108, %p109
      %p111 = scmp.ne.s32.totalorder %s103, %s105
      %p112 = scmp.eq.s32.totalorder %s39, 1
      %p113 = por %p111, %p112
      %p114 = scmp.ne.s32.totalorder %s105, %s106
      %p115 = scmp.eq.s32.totalorder %s39, 0
      %p116 = por %p114, %p115
      %p117 = scmp.ne.s32.totalorder %s105, %s106
      %p118 = scmp.eq.s32.totalorder %s40, 1
      %p119 = por %p117, %p118
      %p121 = scmp.ne.s32.totalorder %s106, %s120
      %p122 = scmp.eq.s32.totalorder %s40, 0
      %p123 = por %p121, %p122
      %s125 = sadd.s32 %s124, 1
      %p128 = scmp.eq.s32.totalorder %s34, 1
      %p129 = scmp.ne.s32.totalorder %s124, %s126
      %p130 = scmp.eq.s32.totalorder %s34, 0
      %p131 = por %p129, %p130
      %p132 = scmp.ne.s32.totalorder %s124, %s126
      %p133 = scmp.eq.s32.totalorder %s39, 1
      %p134 = por %p132, %p133
      %p135 = scmp.ne.s32.totalorder %s126, %s127
      %p136 = scmp.eq.s32.totalorder %s39, 0
      %p137 = por %p135, %p136
      %p138 = scmp.ne.s32.totalorder %s126, %s127
      %p139 = scmp.eq.s32.totalorder %s40, 1
      %p140 = por %p138, %p139
      %p142 = scmp.ne.s32.totalorder %s127, %s141
      %p143 = scmp.eq.s32.totalorder %s40, 0
      %p144 = por %p142, %p143
      %s146 = sadd.s32 %s145, 1
      %p149 = scmp.eq.s32.totalorder %s34, 1
      %p150 = scmp.ne.s32.totalorder %s145, %s147
      %p151 = scmp.eq.s32.totalorder %s34, 0
      %p152 = por %p150, %p151
      %p153 = scmp.ne.s32.totalorder %s145, %s147
      %p154 = scmp.eq.s32.totalorder %s39, 1
      %p155 = por %p153, %p154
      %p156 = scmp.ne.s32.totalorder %s147, %s148
      %p157 = scmp.eq.s32.totalorder %s39, 0
      %p158 = por %p156, %p157
      %p159 = scmp.ne.s32.totalorder %s147, %s148
      %p160 = scmp.eq.s32.totalorder %s40, 1
      %p161 = por %p159, %p160
      %p163 = scmp.ne.s32.totalorder %s148, %s162
      %p164 = scmp.eq.s32.totalorder %s40, 0
      %p165 = por %p163, %p164
      %s167 = sadd.s32 %s166, 1
      %p170 = scmp.eq.s32.totalorder %s34, 1
      %p171 = scmp.ne.s32.totalorder %s166, %s168
      %p172 = scmp.eq.s32.totalorder %s34, 0
      %p173 = por %p171, %p172
      %p174 = scmp.ne.s32.totalorder %s166, %s168
      %p175 = scmp.eq.s32.totalorder %s39, 1
      %p176 = por %p174, %p175
      %p177 = scmp.ne.s32.totalorder %s168, %s169
      %p178 = scmp.eq.s32.totalorder %s39, 0
      %p179 = por %p177, %p178
      %p180 = scmp.ne.s32.totalorder %s168, %s169
      %p181 = scmp.eq.s32.totalorder %s40, 1
      %p182 = por %p180, %p181
      %p184 = scmp.ne.s32.totalorder %s169, %s183
      %p185 = scmp.eq.s32.totalorder %s40, 0
      %p186 = por %p184, %p185
      %s188 = sadd.s32 %s187, 1
      %p191 = scmp.eq.s32.totalorder %s34, 1
      %p192 = scmp.ne.s32.totalorder %s187, %s189
      %p193 = scmp.eq.s32.totalorder %s34, 0
      %p194 = por %p192, %p193
      %p195 = scmp.ne.s32.totalorder %s187, %s189
      %p196 = scmp.eq.s32.totalorder %s39, 1
      %p197 = por %p195, %p196
      %p198 = scmp.ne.s32.totalorder %s189, %s190
      %p199 = scmp.eq.s32.totalorder %s39, 0
      %p200 = por %p198, %p199
      %p201 = scmp.ne.s32.totalorder %s189, %s190
      %p202 = scmp.eq.s32.totalorder %s40, 1
      %p203 = por %p201, %p202
      %p205 = scmp.ne.s32.totalorder %s190, %s204
      %p206 = scmp.eq.s32.totalorder %s40, 0
      %p207 = por %p205, %p206
      %s209 = sadd.s32 %s208, 1
      %p212 = scmp.eq.s32.totalorder %s34, 1
      %p213 = scmp.ne.s32.totalorder %s208, %s210
      %p214 = scmp.eq.s32.totalorder %s34, 0
      %p215 = por %p213, %p214
      %p216 = scmp.ne.s32.totalorder %s208, %s210
      %p217 = scmp.eq.s32.totalorder %s39, 1
      %p218 = por %p216, %p217
      %p219 = scmp.ne.s32.totalorder %s210, %s211
      %p220 = scmp.eq.s32.totalorder %s39, 0
      %p221 = por %p219, %p220
      %p222 = scmp.ne.s32.totalorder %s210, %s211
      %p223 = scmp.eq.s32.totalorder %s40, 1
      %p224 = por %p222, %p223
      %p226 = scmp.ne.s32.totalorder %s211, %s225
      %p227 = scmp.eq.s32.totalorder %s40, 0
      %p228 = por %p226, %p227
      %s230 = sadd.s32 %s229, 1
      %p233 = scmp.eq.s32.totalorder %s34, 1
      %p234 = scmp.ne.s32.totalorder %s229, %s231
      %p235 = scmp.eq.s32.totalorder %s34, 0
      %p236 = por %p234, %p235
      %p237 = scmp.ne.s32.totalorder %s229, %s231
      %p238 = scmp.eq.s32.totalorder %s39, 1
      %p239 = por %p237, %p238
      %p240 = scmp.ne.s32.totalorder %s231, %s232
      %p241 = scmp.eq.s32.totalorder %s39, 0
      %p242 = por %p240, %p241
      %p243 = scmp.ne.s32.totalorder %s231, %s232
      %p244 = scmp.eq.s32.totalorder %s40, 1
      %p245 = por %p243, %p244
      %p247 = scmp.ne.s32.totalorder %s232, %s246
      %p248 = scmp.eq.s32.totalorder %s40, 0
      %p249 = por %p247, %p248
      %s250 = ssub.s32 %s41, %s53
      %s251 = ssub.s32 %s42, %s49
      %s252 = sor.u32 %s250, %s251
      %p253 = scmp.eq.s32.totalorder %s252, 0
      %s255 = sadd.s32 %s254, 1
      %s256 = scalar_select %p253, %s254, %s255
      %p259 = pneg %p253
      %p260 = scmp.eq.s32.totalorder %s34, 1
      %p261 = por %p259, %p260
      %p262 = scmp.ne.s32.totalorder %s254, %s257
      %p263 = scmp.eq.s32.totalorder %s34, 0
      %p264 = por %p262, %p263
      %p265 = scmp.ne.s32.totalorder %s254, %s257
      %p266 = scmp.eq.s32.totalorder %s39, 1
      %p267 = por %p265, %p266
      %p268 = scmp.ne.s32.totalorder %s257, %s258
      %p269 = scmp.eq.s32.totalorder %s39, 0
      %p270 = por %p268, %p269
      %p271 = scmp.ne.s32.totalorder %s257, %s258
      %p272 = scmp.eq.s32.totalorder %s40, 1
      %p273 = por %p271, %p272
      %p275 = scmp.ne.s32.totalorder %s258, %s274
      %p276 = scmp.eq.s32.totalorder %s40, 0
      %p277 = por %p275, %p276
      %s278 = ssub.s32 %s41, %s53
      %s279 = ssub.s32 %s42, %s49
      %s280 = sor.u32 %s278, %s279
      %p281 = scmp.eq.s32.totalorder %s280, 0
      %s283 = sadd.s32 %s282, 1
      %s284 = scalar_select %p281, %s282, %s283
      %p287 = pneg %p281
      %p288 = scmp.eq.s32.totalorder %s34, 1
      %p289 = por %p287, %p288
      %p290 = scmp.ne.s32.totalorder %s282, %s285
      %p291 = scmp.eq.s32.totalorder %s34, 0
      %p292 = por %p290, %p291
      %p293 = scmp.ne.s32.totalorder %s282, %s285
      %p294 = scmp.eq.s32.totalorder %s39, 1
      %p295 = por %p293, %p294
      %p296 = scmp.ne.s32.totalorder %s285, %s286
      %p297 = scmp.eq.s32.totalorder %s39, 0
      %p298 = por %p296, %p297
      %p299 = scmp.ne.s32.totalorder %s285, %s286
      %p300 = scmp.eq.s32.totalorder %s40, 1
      %p301 = por %p299, %p300
      %p303 = scmp.ne.s32.totalorder %s286, %s302
      %p304 = scmp.eq.s32.totalorder %s40, 0
      %p305 = por %p303, %p304
      %s306 = ssub.s32 %s41, %s53
      %s307 = ssub.s32 %s42, %s49
      %s308 = sor.u32 %s306, %s307
      %p309 = scmp.eq.s32.totalorder %s308, 0
      %s311 = sadd.s32 %s310, 1
      %s312 = scalar_select %p309, %s310, %s311
      %p315 = pneg %p309
      %p316 = scmp.eq.s32.totalorder %s34, 1
      %p317 = por %p315, %p316
      %p318 = scmp.ne.s32.totalorder %s310, %s313
      %p319 = scmp.eq.s32.totalorder %s34, 0
      %p320 = por %p318, %p319
      %p321 = scmp.ne.s32.totalorder %s310, %s313
      %p322 = scmp.eq.s32.totalorder %s39, 1
      %p323 = por %p321, %p322
      %p324 = scmp.ne.s32.totalorder %s313, %s314
      %p325 = scmp.eq.s32.totalorder %s39, 0
      %p326 = por %p324, %p325
      %p327 = scmp.ne.s32.totalorder %s313, %s314
      %p328 = scmp.eq.s32.totalorder %s40, 1
      %p329 = por %p327, %p328
      %p331 = scmp.ne.s32.totalorder %s314, %s330
      %p332 = scmp.eq.s32.totalorder %s40, 0
      %p333 = por %p331, %p332
      %s334 = ssub.s32 %s41, %s53
      %s335 = ssub.s32 %s42, %s49
      %s336 = sor.u32 %s334, %s335
      %p337 = scmp.eq.s32.totalorder %s336, 0
      %s339 = sadd.s32 %s338, 1
      %s340 = scalar_select %p337, %s338, %s339
      %p343 = pneg %p337
      %p344 = scmp.eq.s32.totalorder %s34, 1
      %p345 = por %p343, %p344
      %p346 = scmp.ne.s32.totalorder %s338, %s341
      %p347 = scmp.eq.s32.totalorder %s34, 0
      %p348 = por %p346, %p347
      %p349 = scmp.ne.s32.totalorder %s338, %s341
      %p350 = scmp.eq.s32.totalorder %s39, 1
      %p351 = por %p349, %p350
      %p352 = scmp.ne.s32.totalorder %s341, %s342
      %p353 = scmp.eq.s32.totalorder %s39, 0
      %p354 = por %p352, %p353
      %p355 = scmp.ne.s32.totalorder %s341, %s342
      %p356 = scmp.eq.s32.totalorder %s40, 1
      %p357 = por %p355, %p356
      %p359 = scmp.ne.s32.totalorder %s342, %s358
      %p360 = scmp.eq.s32.totalorder %s40, 0
      %p361 = por %p359, %p360
      %p362 = scmp.le.s32.totalorder 1, %s34
      %p363 = scmp.lt.s32.totalorder %s34, 3
      %p364 = pnand %p362, %p363
      %p365 = pneg %p364
      // Predicated region
      $region9: #{tpu_custom_call.1} parent=5 // pred_check
        _
      $region10: #{tpu_custom_call.1} parent=5 // pred_check_branch
        %367 = sbr.rel (%p364) target = $region12
      $region11: #{tpu_custom_call.1} parent=5 // pred_region
        %s368 = ssub.s32 %s34, 1
        // Predicated region
        $region13: #{tpu_custom_call.1} parent=11 // pred_check
          %p369 = pneg %p95
        $region14: #{tpu_custom_call.1} parent=11 // pred_check_branch
          %371 = sbr.rel (%p369) target = $region16
        $region15: #{tpu_custom_call.1} parent=11 // pred_region
          %s373 = ssub.s32 1024, 1024
          %374 = vsyncadd [#allocation6], %s373
          %s375 = sshll.u32 [#allocation5], 4
          %s376 = int_to_ptr.vmem [resolvable:$true] %s375
          %381 = dma.hbm_to_vmem [thread:$0]  %s1, 1024, %s376, [#allocation6], 64, 64, 4
        $region16: #{tpu_custom_call.1} parent=11 // pred_fallthru
          _
        // Predicated region
        $region17: #{tpu_custom_call.1} parent=11 // pred_check
          %p382 = pneg %p116
        $region18: #{tpu_custom_call.1} parent=11 // pred_check_branch
          %384 = sbr.rel (%p382) target = $region20
        $region19: #{tpu_custom_call.1} parent=11 // pred_region
          _
        $region20: #{tpu_custom_call.1} parent=11 // pred_fallthru
          _
        // Predicated region
        $region21: #{tpu_custom_call.1} parent=11 // pred_check
          %p385 = pneg %p137
        $region22: #{tpu_custom_call.1} parent=11 // pred_check_branch
          %387 = sbr.rel (%p385) target = $region24
        $region23: #{tpu_custom_call.1} parent=11 // pred_region
          %s389 = ssub.s32 1024, 1024
          %390 = vsyncadd [#allocation6], %s389
          %s391 = sshll.u32 [#allocation7], 4
          %s392 = int_to_ptr.vmem [resolvable:$true] %s391
          %397 = dma.hbm_to_vmem [thread:$0]  %s3, 1024, %s392, [#allocation6], 64, 64, 4
        $region24: #{tpu_custom_call.1} parent=11 // pred_fallthru
          _
        // Predicated region
        $region25: #{tpu_custom_call.1} parent=11 // pred_check
          %p398 = pneg %p158
        $region26: #{tpu_custom_call.1} parent=11 // pred_check_branch
          %400 = sbr.rel (%p398) target = $region28
        $region27: #{tpu_custom_call.1} parent=11 // pred_region
          _
        $region28: #{tpu_custom_call.1} parent=11 // pred_fallthru
          _
        // Predicated region
        $region29: #{tpu_custom_call.1} parent=11 // pred_check
          %p401 = pneg %p179
        $region30: #{tpu_custom_call.1} parent=11 // pred_check_branch
          %403 = sbr.rel (%p401) target = $region32
        $region31: #{tpu_custom_call.1} parent=11 // pred_region
          %s405 = ssub.s32 4096, 4096
          %406 = vsyncadd [#allocation9], %s405
          %s407 = sshll.u32 [#allocation8], 4
          %s408 = int_to_ptr.vmem [resolvable:$true] %s407
          %413 = dma.hbm_to_vmem [thread:$0]  %s5, 4096, %s408, [#allocation9], 64, 64, 4
        $region32: #{tpu_custom_call.1} parent=11 // pred_fallthru
          _
        // Predicated region
        $region33: #{tpu_custom_call.1} parent=11 // pred_check
          %p414 = pneg %p200
        $region34: #{tpu_custom_call.1} parent=11 // pred_check_branch
          %416 = sbr.rel (%p414) target = $region36
        $region35: #{tpu_custom_call.1} parent=11 // pred_region
          %s418 = ssub.s32 1024, 1024
          %419 = vsyncadd [#allocation9], %s418
          %s420 = sshll.u32 [#allocation10], 4
          %s421 = int_to_ptr.vmem [resolvable:$true] %s420
          %426 = dma.hbm_to_vmem [thread:$0]  %s6, 1024, %s421, [#allocation9], 64, 64, 4
        $region36: #{tpu_custom_call.1} parent=11 // pred_fallthru
          _
        // Predicated region
        $region37: #{tpu_custom_call.1} parent=11 // pred_check
          %p427 = pneg %p221
        $region38: #{tpu_custom_call.1} parent=11 // pred_check_branch
          %429 = sbr.rel (%p427) target = $region40
        $region39: #{tpu_custom_call.1} parent=11 // pred_region
          %s431 = ssub.s32 1024, 1024
          %432 = vsyncadd [#allocation12], %s431
          %s433 = sshll.u32 [#allocation11], 4
          %s434 = int_to_ptr.vmem [resolvable:$true] %s433
          %439 = dma.hbm_to_vmem [thread:$0]  %s7, 1024, %s434, [#allocation12], 64, 64, 4
        $region40: #{tpu_custom_call.1} parent=11 // pred_fallthru
          _
        // Predicated region
        $region41: #{tpu_custom_call.1} parent=11 // pred_check
          %p440 = pneg %p242
        $region42: #{tpu_custom_call.1} parent=11 // pred_check_branch
          %442 = sbr.rel (%p440) target = $region44
        $region43: #{tpu_custom_call.1} parent=11 // pred_region
          _
        $region44: #{tpu_custom_call.1} parent=11 // pred_fallthru
          _
      $region12: #{tpu_custom_call.1} parent=5 // pred_fallthru
        _
      %p443 = scmp.lt.s32.totalorder %s34, 2
      // Predicated region
      $region45: #{tpu_custom_call.1} parent=5 // pred_check
        %p444 = pneg %p443
      $region46: #{tpu_custom_call.1} parent=5 // pred_check_branch
        %446 = sbr.rel (%p444) target = $region48
      $region47: #{tpu_custom_call.1} parent=5 // pred_region
        // Predicated region
        $region49: #{tpu_custom_call.1} parent=47 // pred_check
          %p447 = pneg %p68
        $region50: #{tpu_custom_call.1} parent=47 // pred_check_branch
          %449 = sbr.rel (%p447) target = $region52
        $region51: #{tpu_custom_call.1} parent=47 // pred_region
          %s450 = sand.u32 %s58, 1
          %s451 = scalar_lea.sflag [#allocation3], %s450
          %s452 = sand.u32 %s58, 1
          %s453 = smul.addr %s452, 64
          %s454 = scalar_lea.vmem [#allocation2], %s453
          %s455 = smul.u32 16, %s42
          %s457 = ssub.s32 1024, 1024
          %458 = vsyncadd %s451, %s457
          %s459 = smul.addr %s41, 16
          %s460 = sadd.s32 %s455, %s459
          %s461 = smul.addr %s460, 64
          %s462 = scalar_lea.hbm %s0, %s461
          %s463 = sshll.u32 %s454, 4
          %s464 = int_to_ptr.vmem [resolvable:$true] %s463
          %469 = dma.hbm_to_vmem [thread:$0]  %s462, 1024, %s464, %s451, 64, 64, 4
        $region52: #{tpu_custom_call.1} parent=47 // pred_fallthru
          _
      $region48: #{tpu_custom_call.1} parent=5 // pred_fallthru
        _
      %p470 = scmp.le.s32.totalorder 1, %s34
      %p471 = scmp.lt.s32.totalorder %s34, 3
      %p472 = pnand %p470, %p471
      %p473 = pneg %p472
      // Predicated region
      $region53: #{tpu_custom_call.1} parent=5 // pred_check
        _
      $region54: #{tpu_custom_call.1} parent=5 // pred_check_branch
        %475 = sbr.rel (%p472) target = $region56
      $region55: #{tpu_custom_call.1} parent=5 // pred_region
        %s476 = ssub.s32 %s34, 1
        %s477 = sand.u32 %s61, 1
        %s478 = scalar_lea.sflag [#allocation3], %s477
        %s479 = sand.u32 %s61, 1
        %s480 = smul.addr %s479, 64
        %s481 = scalar_lea.vmem [#allocation2], %s480
        // Predicated region
        $region57: #{tpu_custom_call.1} parent=55 // pred_check
          %p482 = pneg %p74
        $region58: #{tpu_custom_call.1} parent=55 // pred_check_branch
          %484 = sbr.rel (%p482) target = $region60
        $region59: #{tpu_custom_call.1} parent=55 // pred_region
          %485 = dma.done %s478, 1024
        $region60: #{tpu_custom_call.1} parent=55 // pred_fallthru
          _
        // Predicated region
        $region61: #{tpu_custom_call.1} parent=55 // pred_check
          %p486 = pneg %p95
        $region62: #{tpu_custom_call.1} parent=55 // pred_check_branch
          %488 = sbr.rel (%p486) target = $region64
        $region63: #{tpu_custom_call.1} parent=55 // pred_region
          %489 = dma.done [#allocation6], 1024
        $region64: #{tpu_custom_call.1} parent=55 // pred_fallthru
          _
        // Predicated region
        $region65: #{tpu_custom_call.1} parent=55 // pred_check
          %p490 = pneg %p137
        $region66: #{tpu_custom_call.1} parent=55 // pred_check_branch
          %492 = sbr.rel (%p490) target = $region68
        $region67: #{tpu_custom_call.1} parent=55 // pred_region
          %493 = dma.done [#allocation6], 1024
        $region68: #{tpu_custom_call.1} parent=55 // pred_fallthru
          _
        // Predicated region
        $region69: #{tpu_custom_call.1} parent=55 // pred_check
          %p494 = pneg %p179
        $region70: #{tpu_custom_call.1} parent=55 // pred_check_branch
          %496 = sbr.rel (%p494) target = $region72
        $region71: #{tpu_custom_call.1} parent=55 // pred_region
          %497 = dma.done [#allocation9], 4096
        $region72: #{tpu_custom_call.1} parent=55 // pred_fallthru
          _
        // Predicated region
        $region73: #{tpu_custom_call.1} parent=55 // pred_check
          %p498 = pneg %p200
        $region74: #{tpu_custom_call.1} parent=55 // pred_check_branch
          %500 = sbr.rel (%p498) target = $region76
        $region75: #{tpu_custom_call.1} parent=55 // pred_region
          %501 = dma.done [#allocation9], 1024
        $region76: #{tpu_custom_call.1} parent=55 // pred_fallthru
          _
        // Predicated region
        $region77: #{tpu_custom_call.1} parent=55 // pred_check
          %p502 = pneg %p221
        $region78: #{tpu_custom_call.1} parent=55 // pred_check_branch
          %504 = sbr.rel (%p502) target = $region80
        $region79: #{tpu_custom_call.1} parent=55 // pred_region
          %505 = dma.done [#allocation12], 1024
        $region80: #{tpu_custom_call.1} parent=55 // pred_fallthru
          _
        %s506 = sand.u32 %s61, 1
        %s507 = scalar_lea.sflag [#allocation3], %s506
        %s508 = sand.u32 %s61, 1
        %s509 = smul.addr %s508, 64
        %s510 = scalar_lea.vmem [#allocation2], %s509
        %p511 = pneg %p74
        %p512 = pneg %p71
        %p513 = pneg %p95
        %p514 = pneg %p92
        %p515 = pneg %p116
        %p516 = pneg %p113
        %p517 = pneg %p137
        %p518 = pneg %p134
        %p519 = pneg %p158
        %p520 = pneg %p155
        %p521 = pneg %p179
        %p522 = pneg %p176
        %p523 = pneg %p200
        %p524 = pneg %p197
        %p525 = pneg %p221
        %p526 = pneg %p218
        %p527 = pneg %p242
        %p528 = pneg %p239
        %p529 = pneg %p270
        %p530 = pneg %p267
        %s531 = sand.u32 %s257, 1
        %s532 = scalar_lea.sflag [#allocation4], %s531
        %s533 = sand.u32 %s257, 1
        %s534 = smul.addr %s533, 256
        %s535 = scalar_lea.vmem [#allocation13], %s534
        %p536 = pneg %p298
        %p537 = pneg %p295
        %s538 = sand.u32 %s39, 1
        %s539 = scalar_lea.sflag [#allocation15], %s538
        %s540 = sand.u32 %s285, 1
        %s541 = smul.addr %s540, 64
        %s542 = scalar_lea.vmem [#allocation14], %s541
        %p543 = pneg %p326
        %p544 = pneg %p323
        %s545 = sand.u32 %s39, 1
        %s546 = scalar_lea.sflag [#allocation15], %s545
        %s547 = sand.u32 %s313, 1
        %s548 = smul.addr %s547, 64
        %s549 = scalar_lea.vmem [#allocation16], %s548
        %p550 = pneg %p354
        %p551 = pneg %p351
        %s552 = sand.u32 %s341, 1
        %s553 = scalar_lea.sflag [#allocation18], %s552
        %s554 = sand.u32 %s341, 1
        %s555 = smul.addr %s554, 64
        %s556 = scalar_lea.vmem [#allocation17], %s555
        %s557 = smul.u32 16, %s44
        %s558 = smul.u32 16, %s44
        %s559 = smul.u32 16, %s44
        %s560 = smul.u32 16, %s44
        %s561 = smul.u32 16, %s44
        %v563 = vld [vmem:[%s481] sm:$0xf]
        %v564 = vld [vmem:[%s481 + $0x4] sm:$0xf]
        %v565 = vld [vmem:[%s481 + $0x8] sm:$0xf]
        %v566 = vld [vmem:[%s481 + $0xc] sm:$0xf]
        %v567 = vld [vmem:[%s481 + $0x10] sm:$0xf]
        %v568 = vld [vmem:[%s481 + $0x14] sm:$0xf]
        %v569 = vld [vmem:[%s481 + $0x18] sm:$0xf]
        %v570 = vld [vmem:[%s481 + $0x1c] sm:$0xf]
        %v571 = vld [vmem:[%s481 + $0x20] sm:$0xf]
        %v572 = vld [vmem:[%s481 + $0x24] sm:$0xf]
        %v573 = vld [vmem:[%s481 + $0x28] sm:$0xf]
        %v574 = vld [vmem:[%s481 + $0x2c] sm:$0xf]
        %v575 = vld [vmem:[%s481 + $0x30] sm:$0xf]
        %v576 = vld [vmem:[%s481 + $0x34] sm:$0xf]
        %v577 = vld [vmem:[%s481 + $0x38] sm:$0xf]
        %v578 = vld [vmem:[%s481 + $0x3c] sm:$0xf]
        %v579 = vld [vmem:[#allocation5] sm:$0xf]
        %v580 = vld [vmem:[#allocation5 + $0x4] sm:$0xf]
        %v581 = vld [vmem:[#allocation5 + $0x8] sm:$0xf]
        %v582 = vld [vmem:[#allocation5 + $0xc] sm:$0xf]
        %v583 = vld [vmem:[#allocation5 + $0x10] sm:$0xf]
        %v584 = vld [vmem:[#allocation5 + $0x14] sm:$0xf]
        %v585 = vld [vmem:[#allocation5 + $0x18] sm:$0xf]
        %v586 = vld [vmem:[#allocation5 + $0x1c] sm:$0xf]
        %v587 = vld [vmem:[#allocation5 + $0x20] sm:$0xf]
        %v588 = vld [vmem:[#allocation5 + $0x24] sm:$0xf]
        %v589 = vld [vmem:[#allocation5 + $0x28] sm:$0xf]
        %v590 = vld [vmem:[#allocation5 + $0x2c] sm:$0xf]
        %v591 = vld [vmem:[#allocation5 + $0x30] sm:$0xf]
        %v592 = vld [vmem:[#allocation5 + $0x34] sm:$0xf]
        %v593 = vld [vmem:[#allocation5 + $0x38] sm:$0xf]
        %v594 = vld [vmem:[#allocation5 + $0x3c] sm:$0xf]
        %v595 = vld [vmem:[%s2] sm:$0x1]
        %v597 = vlaneseq
        %v598 = vshrl.u32 %v597, 7
        %v599 = vsub.s32 0, %v598
        %v600 = vrot.slane %v595, %v599
        %v618 = vunpack.c.l.b16 %v563
        %v619 = vunpack.c.l.b16 %v564
        %v620 = vunpack.c.l.b16 %v565
        %v621 = vunpack.c.l.b16 %v566
        %v622 = vunpack.c.l.b16 %v567
        %v623 = vunpack.c.l.b16 %v568
        %v624 = vunpack.c.l.b16 %v569
        %v625 = vunpack.c.l.b16 %v570
        %v626 = vunpack.c.l.b16 %v571
        %v627 = vunpack.c.l.b16 %v572
        %v628 = vunpack.c.l.b16 %v573
        %v629 = vunpack.c.l.b16 %v574
        %v630 = vunpack.c.l.b16 %v575
        %v631 = vunpack.c.l.b16 %v576
        %v632 = vunpack.c.l.b16 %v577
        %v633 = vunpack.c.l.b16 %v578
        %v634 = vpack.c.b16 %v619, %v618
        %v635 = vpack.c.b16 %v621, %v620
        %v636 = vpack.c.b16 %v623, %v622
        %v637 = vpack.c.b16 %v625, %v624
        %v638 = vpack.c.b16 %v627, %v626
        %v639 = vpack.c.b16 %v629, %v628
        %v640 = vpack.c.b16 %v631, %v630
        %v641 = vpack.c.b16 %v633, %v632
        %v666 = vunpack.c.l.b16 %v579
        %v667 = vunpack.c.l.b16 %v580
        %v668 = vunpack.c.l.b16 %v581
        %v669 = vunpack.c.l.b16 %v582
        %v670 = vunpack.c.l.b16 %v583
        %v671 = vunpack.c.l.b16 %v584
        %v672 = vunpack.c.l.b16 %v585
        %v673 = vunpack.c.l.b16 %v586
        %v674 = vunpack.c.l.b16 %v587
        %v675 = vunpack.c.l.b16 %v588
        %v676 = vunpack.c.l.b16 %v589
        %v677 = vunpack.c.l.b16 %v590
        %v678 = vunpack.c.l.b16 %v591
        %v679 = vunpack.c.l.b16 %v592
        %v680 = vunpack.c.l.b16 %v593
        %v681 = vunpack.c.l.b16 %v594
        %v682 = vpack.c.b16 %v667, %v666
        %v683 = vpack.c.b16 %v669, %v668
        %v684 = vpack.c.b16 %v671, %v670
        %v685 = vpack.c.b16 %v673, %v672
        %v686 = vpack.c.b16 %v675, %v674
        %v687 = vpack.c.b16 %v677, %v676
        %v688 = vpack.c.b16 %v679, %v678
        %v689 = vpack.c.b16 %v681, %v680
        %698 = vmatprep.subr.bf16.mxu0 0
        %699 = vmatpush1.bf16.msra.mxu0 %v689
        %700 = vmatprep.subr.bf16.mxu0 0
        %701 = vmatpush1.bf16.msra.mxu0 %v688
        %702 = vmatprep.subr.bf16.mxu0 0
        %703 = vmatpush1.bf16.msra.mxu0 %v687
        %704 = vmatprep.subr.bf16.mxu0 0
        %705 = vmatpush1.bf16.msra.mxu0 %v686
        %706 = vmatprep.subr.bf16.mxu0 0
        %707 = vmatpush1.bf16.msra.mxu0 %v685
        %708 = vmatprep.subr.bf16.mxu0 0
        %709 = vmatpush1.bf16.msra.mxu0 %v684
        %710 = vmatprep.subr.bf16.mxu0 0
        %711 = vmatpush1.bf16.msra.mxu0 %v683
        %712 = vmatprep.subr.bf16.mxu0 0
        %713 = vmatpush1.bf16.msra.mxu0 %v682
        %714 = vmatprep.subr.bf16.mxu0 0
        %715 = vmatpush2.bf16.msra.mxu0 0
        %716 = vmatprep.subr.bf16.mxu0 0
        %717 = vmatpush2.bf16.msra.mxu0 0
        %718 = vmatprep.subr.bf16.mxu0 0
        %719 = vmatpush2.bf16.msra.mxu0 0
        %720 = vmatprep.subr.bf16.mxu0 0
        %721 = vmatpush2.bf16.msra.mxu0 0
        %722 = vmatprep.subr.bf16.mxu0 0
        %723 = vmatpush2.bf16.msra.mxu0 0
        %724 = vmatprep.subr.bf16.mxu0 0
        %725 = vmatpush2.bf16.msra.mxu0 0
        %726 = vmatprep.subr.bf16.mxu0 0
        %727 = vmatpush2.bf16.msra.mxu0 0
        %728 = vmatprep.subr.bf16.mxu0 0
        %729 = vmatpush2.bf16.msra.mxu0 0
        %730 = vmatprep.mubr.bf16.mxu0 0
        %731 = vmatmul.mubr.bf16.gmra.mxu0 %v634
        %v732 = vpop.f32.mrf.mxu0
        %v733 = vadd.f32 %v600, %v732
        %v734 = vpop.f32.mrf.mxu0
        %v735 = vpop.f32.mrf.mxu0
        %v736 = vadd.f32 %v600, %v735
        %v737 = vpop.f32.mrf.mxu0
        %738 = vmatprep.mubr.bf16.mxu0 0
        %739 = vmatmul.mubr.bf16.gmra.mxu0 %v635
        %v740 = vpop.f32.mrf.mxu0
        %v741 = vadd.f32 %v600, %v740
        %v742 = vpop.f32.mrf.mxu0
        %v743 = vpop.f32.mrf.mxu0
        %v744 = vadd.f32 %v600, %v743
        %v745 = vpop.f32.mrf.mxu0
        %746 = vmatprep.mubr.bf16.mxu0 0
        %747 = vmatmul.mubr.bf16.gmra.mxu0 %v636
        %v748 = vpop.f32.mrf.mxu0
        %v749 = vadd.f32 %v600, %v748
        %v750 = vpop.f32.mrf.mxu0
        %v751 = vpop.f32.mrf.mxu0
        %v752 = vadd.f32 %v600, %v751
        %v753 = vpop.f32.mrf.mxu0
        %754 = vmatprep.mubr.bf16.mxu0 0
        %755 = vmatmul.mubr.bf16.gmra.mxu0 %v637
        %v756 = vpop.f32.mrf.mxu0
        %v757 = vadd.f32 %v600, %v756
        %v758 = vpop.f32.mrf.mxu0
        %v759 = vpop.f32.mrf.mxu0
        %v760 = vadd.f32 %v600, %v759
        %v761 = vpop.f32.mrf.mxu0
        %762 = vmatprep.mubr.bf16.mxu0 0
        %763 = vmatmul.mubr.bf16.gmra.mxu0 %v638
        %v764 = vpop.f32.mrf.mxu0
        %v765 = vadd.f32 %v600, %v764
        %v766 = vpop.f32.mrf.mxu0
        %v767 = vpop.f32.mrf.mxu0
        %v768 = vadd.f32 %v600, %v767
        %v769 = vpop.f32.mrf.mxu0
        %770 = vmatprep.mubr.bf16.mxu0 0
        %771 = vmatmul.mubr.bf16.gmra.mxu0 %v639
        %v772 = vpop.f32.mrf.mxu0
        %v773 = vadd.f32 %v600, %v772
        %v774 = vpop.f32.mrf.mxu0
        %v775 = vpop.f32.mrf.mxu0
        %v776 = vadd.f32 %v600, %v775
        %v777 = vpop.f32.mrf.mxu0
        %778 = vmatprep.mubr.bf16.mxu0 0
        %779 = vmatmul.mubr.bf16.gmra.mxu0 %v640
        %v780 = vpop.f32.mrf.mxu0
        %v781 = vadd.f32 %v600, %v780
        %v782 = vpop.f32.mrf.mxu0
        %v783 = vpop.f32.mrf.mxu0
        %v784 = vadd.f32 %v600, %v783
        %v785 = vpop.f32.mrf.mxu0
        %786 = vmatprep.mubr.bf16.mxu0 0
        %787 = vmatmul.mubr.bf16.gmra.mxu0 %v641
        %v788 = vpop.f32.mrf.mxu0
        %v789 = vadd.f32 %v600, %v788
        %v790 = vpop.f32.mrf.mxu0
        %v791 = vpop.f32.mrf.mxu0
        %v792 = vadd.f32 %v600, %v791
        %v793 = vpop.f32.mrf.mxu0
        %794 = vdwg.mxu0
        %v795 = vmax.f32 %v733, 0.0
        %v796 = vmax.f32 %v736, 0.0
        %v797 = vmax.f32 %v741, 0.0
        %v798 = vmax.f32 %v744, 0.0
        %v799 = vmax.f32 %v749, 0.0
        %v800 = vmax.f32 %v752, 0.0
        %v801 = vmax.f32 %v757, 0.0
        %v802 = vmax.f32 %v760, 0.0
        %v803 = vmax.f32 %v765, 0.0
        %v804 = vmax.f32 %v768, 0.0
        %v805 = vmax.f32 %v773, 0.0
        %v806 = vmax.f32 %v776, 0.0
        %v807 = vmax.f32 %v781, 0.0
        %v808 = vmax.f32 %v784, 0.0
        %v809 = vmax.f32 %v789, 0.0
        %v810 = vmax.f32 %v792, 0.0
        %v811 = vld [vmem:[#allocation7] sm:$0xf]
        %v812 = vld [vmem:[#allocation7 + $0x4] sm:$0xf]
        %v813 = vld [vmem:[#allocation7 + $0x8] sm:$0xf]
        %v814 = vld [vmem:[#allocation7 + $0xc] sm:$0xf]
        %v815 = vld [vmem:[#allocation7 + $0x10] sm:$0xf]
        %v816 = vld [vmem:[#allocation7 + $0x14] sm:$0xf]
        %v817 = vld [vmem:[#allocation7 + $0x18] sm:$0xf]
        %v818 = vld [vmem:[#allocation7 + $0x1c] sm:$0xf]
        %v819 = vld [vmem:[#allocation7 + $0x20] sm:$0xf]
        %v820 = vld [vmem:[#allocation7 + $0x24] sm:$0xf]
        %v821 = vld [vmem:[#allocation7 + $0x28] sm:$0xf]
        %v822 = vld [vmem:[#allocation7 + $0x2c] sm:$0xf]
        %v823 = vld [vmem:[#allocation7 + $0x30] sm:$0xf]
        %v824 = vld [vmem:[#allocation7 + $0x34] sm:$0xf]
        %v825 = vld [vmem:[#allocation7 + $0x38] sm:$0xf]
        %v826 = vld [vmem:[#allocation7 + $0x3c] sm:$0xf]
        %v827 = vld [vmem:[%s4] sm:$0x1]
        %v829 = vlaneseq
        %v830 = vshrl.u32 %v829, 7
        %v831 = vsub.s32 0, %v830
        %v832 = vrot.slane %v827, %v831
        %v850 = vunpack.c.l.b16 %v811
        %v851 = vunpack.c.l.b16 %v812
        %v852 = vunpack.c.l.b16 %v813
        %v853 = vunpack.c.l.b16 %v814
        %v854 = vunpack.c.l.b16 %v815
        %v855 = vunpack.c.l.b16 %v816
        %v856 = vunpack.c.l.b16 %v817
        %v857 = vunpack.c.l.b16 %v818
        %v858 = vunpack.c.l.b16 %v819
        %v859 = vunpack.c.l.b16 %v820
        %v860 = vunpack.c.l.b16 %v821
        %v861 = vunpack.c.l.b16 %v822
        %v862 = vunpack.c.l.b16 %v823
        %v863 = vunpack.c.l.b16 %v824
        %v864 = vunpack.c.l.b16 %v825
        %v865 = vunpack.c.l.b16 %v826
        %v866 = vpack.c.b16 %v851, %v850
        %v867 = vpack.c.b16 %v853, %v852
        %v868 = vpack.c.b16 %v855, %v854
        %v869 = vpack.c.b16 %v857, %v856
        %v870 = vpack.c.b16 %v859, %v858
        %v871 = vpack.c.b16 %v861, %v860
        %v872 = vpack.c.b16 %v863, %v862
        %v873 = vpack.c.b16 %v865, %v864
        %882 = vmatprep.subr.bf16.mxu0 0
        %883 = vmatpush1.bf16.msra.mxu0 %v873
        %884 = vmatprep.subr.bf16.mxu0 0
        %885 = vmatpush1.bf16.msra.mxu0 %v872
        %886 = vmatprep.subr.bf16.mxu0 0
        %887 = vmatpush1.bf16.msra.mxu0 %v871
        %888 = vmatprep.subr.bf16.mxu0 0
        %889 = vmatpush1.bf16.msra.mxu0 %v870
        %890 = vmatprep.subr.bf16.mxu0 0
        %891 = vmatpush1.bf16.msra.mxu0 %v869
        %892 = vmatprep.subr.bf16.mxu0 0
        %893 = vmatpush1.bf16.msra.mxu0 %v868
        %894 = vmatprep.subr.bf16.mxu0 0
        %895 = vmatpush1.bf16.msra.mxu0 %v867
        %896 = vmatprep.subr.bf16.mxu0 0
        %897 = vmatpush1.bf16.msra.mxu0 %v866
        %898 = vmatprep.subr.bf16.mxu0 0
        %899 = vmatpush2.bf16.msra.mxu0 0
        %900 = vmatprep.subr.bf16.mxu0 0
        %901 = vmatpush2.bf16.msra.mxu0 0
        %902 = vmatprep.subr.bf16.mxu0 0
        %903 = vmatpush2.bf16.msra.mxu0 0
        %904 = vmatprep.subr.bf16.mxu0 0
        %905 = vmatpush2.bf16.msra.mxu0 0
        %906 = vmatprep.subr.bf16.mxu0 0
        %907 = vmatpush2.bf16.msra.mxu0 0
        %908 = vmatprep.subr.bf16.mxu0 0
        %909 = vmatpush2.bf16.msra.mxu0 0
        %910 = vmatprep.subr.bf16.mxu0 0
        %911 = vmatpush2.bf16.msra.mxu0 0
        %912 = vmatprep.subr.bf16.mxu0 0
        %913 = vmatpush2.bf16.msra.mxu0 0
        %914 = vmatprep.mubr.bf16.mxu0 0
        %915 = vmatmul.mubr.bf16.gmra.mxu0 %v634
        %v916 = vpop.f32.mrf.mxu0
        %v917 = vadd.f32 %v832, %v916
        %v918 = vpop.f32.mrf.mxu0
        %v919 = vpop.f32.mrf.mxu0
        %v920 = vadd.f32 %v832, %v919
        %v921 = vpop.f32.mrf.mxu0
        %922 = vmatprep.mubr.bf16.mxu0 0
        %923 = vmatmul.mubr.bf16.gmra.mxu0 %v635
        %v924 = vpop.f32.mrf.mxu0
        %v925 = vadd.f32 %v832, %v924
        %v926 = vpop.f32.mrf.mxu0
        %v927 = vpop.f32.mrf.mxu0
        %v928 = vadd.f32 %v832, %v927
        %v929 = vpop.f32.mrf.mxu0
        %930 = vmatprep.mubr.bf16.mxu0 0
        %931 = vmatmul.mubr.bf16.gmra.mxu0 %v636
        %v932 = vpop.f32.mrf.mxu0
        %v933 = vadd.f32 %v832, %v932
        %v934 = vpop.f32.mrf.mxu0
        %v935 = vpop.f32.mrf.mxu0
        %v936 = vadd.f32 %v832, %v935
        %v937 = vpop.f32.mrf.mxu0
        %938 = vmatprep.mubr.bf16.mxu0 0
        %939 = vmatmul.mubr.bf16.gmra.mxu0 %v637
        %v940 = vpop.f32.mrf.mxu0
        %v941 = vadd.f32 %v832, %v940
        %v942 = vpop.f32.mrf.mxu0
        %v943 = vpop.f32.mrf.mxu0
        %v944 = vadd.f32 %v832, %v943
        %v945 = vpop.f32.mrf.mxu0
        %946 = vmatprep.mubr.bf16.mxu0 0
        %947 = vmatmul.mubr.bf16.gmra.mxu0 %v638
        %v948 = vpop.f32.mrf.mxu0
        %v949 = vadd.f32 %v832, %v948
        %v950 = vpop.f32.mrf.mxu0
        %v951 = vpop.f32.mrf.mxu0
        %v952 = vadd.f32 %v832, %v951
        %v953 = vpop.f32.mrf.mxu0
        %954 = vmatprep.mubr.bf16.mxu0 0
        %955 = vmatmul.mubr.bf16.gmra.mxu0 %v639
        %v956 = vpop.f32.mrf.mxu0
        %v957 = vadd.f32 %v832, %v956
        %v958 = vpop.f32.mrf.mxu0
        %v959 = vpop.f32.mrf.mxu0
        %v960 = vadd.f32 %v832, %v959
        %v961 = vpop.f32.mrf.mxu0
        %962 = vmatprep.mubr.bf16.mxu0 0
        %963 = vmatmul.mubr.bf16.gmra.mxu0 %v640
        %v964 = vpop.f32.mrf.mxu0
        %v965 = vadd.f32 %v832, %v964
        %v966 = vpop.f32.mrf.mxu0
        %v967 = vpop.f32.mrf.mxu0
        %v968 = vadd.f32 %v832, %v967
        %v969 = vpop.f32.mrf.mxu0
        %970 = vmatprep.mubr.bf16.mxu0 0
        %971 = vmatmul.mubr.bf16.gmra.mxu0 %v641
        %v972 = vpop.f32.mrf.mxu0
        %v973 = vadd.f32 %v832, %v972
        %v974 = vpop.f32.mrf.mxu0
        %v975 = vpop.f32.mrf.mxu0
        %v976 = vadd.f32 %v832, %v975
        %v977 = vpop.f32.mrf.mxu0
        %978 = vdwg.mxu0
        %v979 = vmax.f32 %v917, 0.0
        %v980 = vmax.f32 %v920, 0.0
        %v981 = vmax.f32 %v925, 0.0
        %v982 = vmax.f32 %v928, 0.0
        %v983 = vmax.f32 %v933, 0.0
        %v984 = vmax.f32 %v936, 0.0
        %v985 = vmax.f32 %v941, 0.0
        %v986 = vmax.f32 %v944, 0.0
        %v987 = vmax.f32 %v949, 0.0
        %v988 = vmax.f32 %v952, 0.0
        %v989 = vmax.f32 %v957, 0.0
        %v990 = vmax.f32 %v960, 0.0
        %v991 = vmax.f32 %v965, 0.0
        %v992 = vmax.f32 %v968, 0.0
        %v993 = vmax.f32 %v973, 0.0
        %v994 = vmax.f32 %v976, 0.0
        %v995 = vpack.c.bf16 %v796, %v795
        %v996 = vpack.c.bf16 %v798, %v797
        %v997 = vpack.c.bf16 %v800, %v799
        %v998 = vpack.c.bf16 %v802, %v801
        %v999 = vpack.c.bf16 %v804, %v803
        %v1000 = vpack.c.bf16 %v806, %v805
        %v1001 = vpack.c.bf16 %v808, %v807
        %v1002 = vpack.c.bf16 %v810, %v809
        %v1003 = vpack.c.bf16 %v980, %v979
        %v1004 = vpack.c.bf16 %v982, %v981
        %v1005 = vpack.c.bf16 %v984, %v983
        %v1006 = vpack.c.bf16 %v986, %v985
        %v1007 = vpack.c.bf16 %v988, %v987
        %v1008 = vpack.c.bf16 %v990, %v989
        %v1009 = vpack.c.bf16 %v992, %v991
        %v1010 = vpack.c.bf16 %v994, %v993
        %v1019 = vunpack.c.l.b16 %v1003
        %v1020 = vunpack.c.h.b16 %v1003
        %v1021 = vunpack.c.l.b16 %v1004
        %v1022 = vunpack.c.h.b16 %v1004
        %v1023 = vunpack.c.l.b16 %v1005
        %v1024 = vunpack.c.h.b16 %v1005
        %v1025 = vunpack.c.l.b16 %v1006
        %v1026 = vunpack.c.h.b16 %v1006
        %v1027 = vunpack.c.l.b16 %v1007
        %v1028 = vunpack.c.h.b16 %v1007
        %v1029 = vunpack.c.l.b16 %v1008
        %v1030 = vunpack.c.h.b16 %v1008
        %v1031 = vunpack.c.l.b16 %v1009
        %v1032 = vunpack.c.h.b16 %v1009
        %v1033 = vunpack.c.l.b16 %v1010
        %v1034 = vunpack.c.h.b16 %v1010
        %v1035 = vpack.c.b16 %v1019, %v1019
        %v1036 = vpack.c.b16 %v1020, %v1020
        %v1037 = vpack.c.b16 %v1021, %v1021
        %v1038 = vpack.c.b16 %v1022, %v1022
        %v1039 = vpack.c.b16 %v1023, %v1023
        %v1040 = vpack.c.b16 %v1024, %v1024
        %v1041 = vpack.c.b16 %v1025, %v1025
        %v1042 = vpack.c.b16 %v1026, %v1026
        %v1043 = vpack.c.b16 %v1027, %v1027
        %v1044 = vpack.c.b16 %v1028, %v1028
        %v1045 = vpack.c.b16 %v1029, %v1029
        %v1046 = vpack.c.b16 %v1030, %v1030
        %v1047 = vpack.c.b16 %v1031, %v1031
        %v1048 = vpack.c.b16 %v1032, %v1032
        %v1049 = vpack.c.b16 %v1033, %v1033
        %v1050 = vpack.c.b16 %v1034, %v1034
        %1067 = vst [vmem:[%s542] sm:$0xf] %v1035
        %1068 = vst [vmem:[%s542 + $0x4] sm:$0xf] %v1036
        %1069 = vst [vmem:[%s542 + $0x8] sm:$0xf] %v1037
        %1070 = vst [vmem:[%s542 + $0xc] sm:$0xf] %v1038
        %1071 = vst [vmem:[%s542 + $0x10] sm:$0xf] %v1039
        %1072 = vst [vmem:[%s542 + $0x14] sm:$0xf] %v1040
        %1073 = vst [vmem:[%s542 + $0x18] sm:$0xf] %v1041
        %1074 = vst [vmem:[%s542 + $0x1c] sm:$0xf] %v1042
        %1075 = vst [vmem:[%s542 + $0x20] sm:$0xf] %v1043
        %1076 = vst [vmem:[%s542 + $0x24] sm:$0xf] %v1044
        %1077 = vst [vmem:[%s542 + $0x28] sm:$0xf] %v1045
        %1078 = vst [vmem:[%s542 + $0x2c] sm:$0xf] %v1046
        %1079 = vst [vmem:[%s542 + $0x30] sm:$0xf] %v1047
        %1080 = vst [vmem:[%s542 + $0x34] sm:$0xf] %v1048
        %1081 = vst [vmem:[%s542 + $0x38] sm:$0xf] %v1049
        %1082 = vst [vmem:[%s542 + $0x3c] sm:$0xf] %v1050
        %v1083 = vld [vmem:[#allocation10] sm:$0xf]
        %v1084 = vld [vmem:[#allocation10 + $0x4] sm:$0xf]
        %v1085 = vld [vmem:[#allocation10 + $0x8] sm:$0xf]
        %v1086 = vld [vmem:[#allocation10 + $0xc] sm:$0xf]
        %v1087 = vld [vmem:[#allocation10 + $0x10] sm:$0xf]
        %v1088 = vld [vmem:[#allocation10 + $0x14] sm:$0xf]
        %v1089 = vld [vmem:[#allocation10 + $0x18] sm:$0xf]
        %v1090 = vld [vmem:[#allocation10 + $0x1c] sm:$0xf]
        %v1091 = vld [vmem:[#allocation10 + $0x20] sm:$0xf]
        %v1092 = vld [vmem:[#allocation10 + $0x24] sm:$0xf]
        %v1093 = vld [vmem:[#allocation10 + $0x28] sm:$0xf]
        %v1094 = vld [vmem:[#allocation10 + $0x2c] sm:$0xf]
        %v1095 = vld [vmem:[#allocation10 + $0x30] sm:$0xf]
        %v1096 = vld [vmem:[#allocation10 + $0x34] sm:$0xf]
        %v1097 = vld [vmem:[#allocation10 + $0x38] sm:$0xf]
        %v1098 = vld [vmem:[#allocation10 + $0x3c] sm:$0xf]
        %v1099 = vld [vmem:[%s8] sm:$0x1]
        %v1101 = vlaneseq
        %v1102 = vshrl.u32 %v1101, 7
        %v1103 = vsub.s32 0, %v1102
        %v1104 = vrot.slane %v1099, %v1103
        %v1122 = vunpack.c.l.b16 %v1083
        %v1123 = vunpack.c.l.b16 %v1084
        %v1124 = vunpack.c.l.b16 %v1085
        %v1125 = vunpack.c.l.b16 %v1086
        %v1126 = vunpack.c.l.b16 %v1087
        %v1127 = vunpack.c.l.b16 %v1088
        %v1128 = vunpack.c.l.b16 %v1089
        %v1129 = vunpack.c.l.b16 %v1090
        %v1130 = vunpack.c.l.b16 %v1091
        %v1131 = vunpack.c.l.b16 %v1092
        %v1132 = vunpack.c.l.b16 %v1093
        %v1133 = vunpack.c.l.b16 %v1094
        %v1134 = vunpack.c.l.b16 %v1095
        %v1135 = vunpack.c.l.b16 %v1096
        %v1136 = vunpack.c.l.b16 %v1097
        %v1137 = vunpack.c.l.b16 %v1098
        %v1138 = vpack.c.b16 %v1123, %v1122
        %v1139 = vpack.c.b16 %v1125, %v1124
        %v1140 = vpack.c.b16 %v1127, %v1126
        %v1141 = vpack.c.b16 %v1129, %v1128
        %v1142 = vpack.c.b16 %v1131, %v1130
        %v1143 = vpack.c.b16 %v1133, %v1132
        %v1144 = vpack.c.b16 %v1135, %v1134
        %v1145 = vpack.c.b16 %v1137, %v1136
        %1154 = vmatprep.subr.bf16.mxu0 0
        %1155 = vmatpush1.bf16.msra.mxu0 %v1145
        %1156 = vmatprep.subr.bf16.mxu0 0
        %1157 = vmatpush1.bf16.msra.mxu0 %v1144
        %1158 = vmatprep.subr.bf16.mxu0 0
        %1159 = vmatpush1.bf16.msra.mxu0 %v1143
        %1160 = vmatprep.subr.bf16.mxu0 0
        %1161 = vmatpush1.bf16.msra.mxu0 %v1142
        %1162 = vmatprep.subr.bf16.mxu0 0
        %1163 = vmatpush1.bf16.msra.mxu0 %v1141
        %1164 = vmatprep.subr.bf16.mxu0 0
        %1165 = vmatpush1.bf16.msra.mxu0 %v1140
        %1166 = vmatprep.subr.bf16.mxu0 0
        %1167 = vmatpush1.bf16.msra.mxu0 %v1139
        %1168 = vmatprep.subr.bf16.mxu0 0
        %1169 = vmatpush1.bf16.msra.mxu0 %v1138
        %1170 = vmatprep.subr.bf16.mxu0 0
        %1171 = vmatpush2.bf16.msra.mxu0 0
        %1172 = vmatprep.subr.bf16.mxu0 0
        %1173 = vmatpush2.bf16.msra.mxu0 0
        %1174 = vmatprep.subr.bf16.mxu0 0
        %1175 = vmatpush2.bf16.msra.mxu0 0
        %1176 = vmatprep.subr.bf16.mxu0 0
        %1177 = vmatpush2.bf16.msra.mxu0 0
        %1178 = vmatprep.subr.bf16.mxu0 0
        %1179 = vmatpush2.bf16.msra.mxu0 0
        %1180 = vmatprep.subr.bf16.mxu0 0
        %1181 = vmatpush2.bf16.msra.mxu0 0
        %1182 = vmatprep.subr.bf16.mxu0 0
        %1183 = vmatpush2.bf16.msra.mxu0 0
        %1184 = vmatprep.subr.bf16.mxu0 0
        %1185 = vmatpush2.bf16.msra.mxu0 0
        %1186 = vmatprep.mubr.bf16.mxu0 0
        %1187 = vmatmul.mubr.bf16.gmra.mxu0 %v995
        %v1188 = vpop.f32.mrf.mxu0
        %v1189 = vadd.f32 %v1104, %v1188
        %v1190 = vpop.f32.mrf.mxu0
        %v1191 = vpop.f32.mrf.mxu0
        %v1192 = vadd.f32 %v1104, %v1191
        %v1193 = vpop.f32.mrf.mxu0
        %1194 = vmatprep.mubr.bf16.mxu0 0
        %1195 = vmatmul.mubr.bf16.gmra.mxu0 %v996
        %v1196 = vpop.f32.mrf.mxu0
        %v1197 = vadd.f32 %v1104, %v1196
        %v1198 = vpop.f32.mrf.mxu0
        %v1199 = vpop.f32.mrf.mxu0
        %v1200 = vadd.f32 %v1104, %v1199
        %v1201 = vpop.f32.mrf.mxu0
        %1202 = vmatprep.mubr.bf16.mxu0 0
        %1203 = vmatmul.mubr.bf16.gmra.mxu0 %v997
        %v1204 = vpop.f32.mrf.mxu0
        %v1205 = vadd.f32 %v1104, %v1204
        %v1206 = vpop.f32.mrf.mxu0
        %v1207 = vpop.f32.mrf.mxu0
        %v1208 = vadd.f32 %v1104, %v1207
        %v1209 = vpop.f32.mrf.mxu0
        %1210 = vmatprep.mubr.bf16.mxu0 0
        %1211 = vmatmul.mubr.bf16.gmra.mxu0 %v998
        %v1212 = vpop.f32.mrf.mxu0
        %v1213 = vadd.f32 %v1104, %v1212
        %v1214 = vpop.f32.mrf.mxu0
        %v1215 = vpop.f32.mrf.mxu0
        %v1216 = vadd.f32 %v1104, %v1215
        %v1217 = vpop.f32.mrf.mxu0
        %1218 = vmatprep.mubr.bf16.mxu0 0
        %1219 = vmatmul.mubr.bf16.gmra.mxu0 %v999
        %v1220 = vpop.f32.mrf.mxu0
        %v1221 = vadd.f32 %v1104, %v1220
        %v1222 = vpop.f32.mrf.mxu0
        %v1223 = vpop.f32.mrf.mxu0
        %v1224 = vadd.f32 %v1104, %v1223
        %v1225 = vpop.f32.mrf.mxu0
        %1226 = vmatprep.mubr.bf16.mxu0 0
        %1227 = vmatmul.mubr.bf16.gmra.mxu0 %v1000
        %v1228 = vpop.f32.mrf.mxu0
        %v1229 = vadd.f32 %v1104, %v1228
        %v1230 = vpop.f32.mrf.mxu0
        %v1231 = vpop.f32.mrf.mxu0
        %v1232 = vadd.f32 %v1104, %v1231
        %v1233 = vpop.f32.mrf.mxu0
        %1234 = vmatprep.mubr.bf16.mxu0 0
        %1235 = vmatmul.mubr.bf16.gmra.mxu0 %v1001
        %v1236 = vpop.f32.mrf.mxu0
        %v1237 = vadd.f32 %v1104, %v1236
        %v1238 = vpop.f32.mrf.mxu0
        %v1239 = vpop.f32.mrf.mxu0
        %v1240 = vadd.f32 %v1104, %v1239
        %v1241 = vpop.f32.mrf.mxu0
        %1242 = vmatprep.mubr.bf16.mxu0 0
        %1243 = vmatmul.mubr.bf16.gmra.mxu0 %v1002
        %v1244 = vpop.f32.mrf.mxu0
        %v1245 = vadd.f32 %v1104, %v1244
        %v1246 = vpop.f32.mrf.mxu0
        %v1247 = vpop.f32.mrf.mxu0
        %v1248 = vadd.f32 %v1104, %v1247
        %v1249 = vpop.f32.mrf.mxu0
        %1250 = vdwg.mxu0
        %v1251 = vpack.c.bf16 %v1192, %v1189
        %v1252 = vpack.c.bf16 %v1200, %v1197
        %v1253 = vpack.c.bf16 %v1208, %v1205
        %v1254 = vpack.c.bf16 %v1216, %v1213
        %v1255 = vpack.c.bf16 %v1224, %v1221
        %v1256 = vpack.c.bf16 %v1232, %v1229
        %v1257 = vpack.c.bf16 %v1240, %v1237
        %v1258 = vpack.c.bf16 %v1248, %v1245
        %v1267 = vunpack.c.l.b16 %v1251
        %v1268 = vunpack.c.h.b16 %v1251
        %v1269 = vunpack.c.l.b16 %v1252
        %v1270 = vunpack.c.h.b16 %v1252
        %v1271 = vunpack.c.l.b16 %v1253
        %v1272 = vunpack.c.h.b16 %v1253
        %v1273 = vunpack.c.l.b16 %v1254
        %v1274 = vunpack.c.h.b16 %v1254
        %v1275 = vunpack.c.l.b16 %v1255
        %v1276 = vunpack.c.h.b16 %v1255
        %v1277 = vunpack.c.l.b16 %v1256
        %v1278 = vunpack.c.h.b16 %v1256
        %v1279 = vunpack.c.l.b16 %v1257
        %v1280 = vunpack.c.h.b16 %v1257
        %v1281 = vunpack.c.l.b16 %v1258
        %v1282 = vunpack.c.h.b16 %v1258
        %v1283 = vpack.c.b16 %v1267, %v1267
        %v1284 = vpack.c.b16 %v1268, %v1268
        %v1285 = vpack.c.b16 %v1269, %v1269
        %v1286 = vpack.c.b16 %v1270, %v1270
        %v1287 = vpack.c.b16 %v1271, %v1271
        %v1288 = vpack.c.b16 %v1272, %v1272
        %v1289 = vpack.c.b16 %v1273, %v1273
        %v1290 = vpack.c.b16 %v1274, %v1274
        %v1291 = vpack.c.b16 %v1275, %v1275
        %v1292 = vpack.c.b16 %v1276, %v1276
        %v1293 = vpack.c.b16 %v1277, %v1277
        %v1294 = vpack.c.b16 %v1278, %v1278
        %v1295 = vpack.c.b16 %v1279, %v1279
        %v1296 = vpack.c.b16 %v1280, %v1280
        %v1297 = vpack.c.b16 %v1281, %v1281
        %v1298 = vpack.c.b16 %v1282, %v1282
        %1315 = vst [vmem:[%s549] sm:$0xf] %v1283
        %1316 = vst [vmem:[%s549 + $0x4] sm:$0xf] %v1284
        %1317 = vst [vmem:[%s549 + $0x8] sm:$0xf] %v1285
        %1318 = vst [vmem:[%s549 + $0xc] sm:$0xf] %v1286
        %1319 = vst [vmem:[%s549 + $0x10] sm:$0xf] %v1287
        %1320 = vst [vmem:[%s549 + $0x14] sm:$0xf] %v1288
        %1321 = vst [vmem:[%s549 + $0x18] sm:$0xf] %v1289
        %1322 = vst [vmem:[%s549 + $0x1c] sm:$0xf] %v1290
        %1323 = vst [vmem:[%s549 + $0x20] sm:$0xf] %v1291
        %1324 = vst [vmem:[%s549 + $0x24] sm:$0xf] %v1292
        %1325 = vst [vmem:[%s549 + $0x28] sm:$0xf] %v1293
        %1326 = vst [vmem:[%s549 + $0x2c] sm:$0xf] %v1294
        %1327 = vst [vmem:[%s549 + $0x30] sm:$0xf] %v1295
        %1328 = vst [vmem:[%s549 + $0x34] sm:$0xf] %v1296
        %1329 = vst [vmem:[%s549 + $0x38] sm:$0xf] %v1297
        %1330 = vst [vmem:[%s549 + $0x3c] sm:$0xf] %v1298
        %v1331 = vld [vmem:[#allocation11] sm:$0xf]
        %v1332 = vld [vmem:[#allocation11 + $0x4] sm:$0xf]
        %v1333 = vld [vmem:[#allocation11 + $0x8] sm:$0xf]
        %v1334 = vld [vmem:[#allocation11 + $0xc] sm:$0xf]
        %v1335 = vld [vmem:[#allocation11 + $0x10] sm:$0xf]
        %v1336 = vld [vmem:[#allocation11 + $0x14] sm:$0xf]
        %v1337 = vld [vmem:[#allocation11 + $0x18] sm:$0xf]
        %v1338 = vld [vmem:[#allocation11 + $0x1c] sm:$0xf]
        %v1339 = vld [vmem:[#allocation11 + $0x20] sm:$0xf]
        %v1340 = vld [vmem:[#allocation11 + $0x24] sm:$0xf]
        %v1341 = vld [vmem:[#allocation11 + $0x28] sm:$0xf]
        %v1342 = vld [vmem:[#allocation11 + $0x2c] sm:$0xf]
        %v1343 = vld [vmem:[#allocation11 + $0x30] sm:$0xf]
        %v1344 = vld [vmem:[#allocation11 + $0x34] sm:$0xf]
        %v1345 = vld [vmem:[#allocation11 + $0x38] sm:$0xf]
        %v1346 = vld [vmem:[#allocation11 + $0x3c] sm:$0xf]
        %v1363 = vunpack.c.l.b16 %v1331
        %v1364 = vunpack.c.l.b16 %v1332
        %v1365 = vunpack.c.l.b16 %v1333
        %v1366 = vunpack.c.l.b16 %v1334
        %v1367 = vunpack.c.l.b16 %v1335
        %v1368 = vunpack.c.l.b16 %v1336
        %v1369 = vunpack.c.l.b16 %v1337
        %v1370 = vunpack.c.l.b16 %v1338
        %v1371 = vunpack.c.l.b16 %v1339
        %v1372 = vunpack.c.l.b16 %v1340
        %v1373 = vunpack.c.l.b16 %v1341
        %v1374 = vunpack.c.l.b16 %v1342
        %v1375 = vunpack.c.l.b16 %v1343
        %v1376 = vunpack.c.l.b16 %v1344
        %v1377 = vunpack.c.l.b16 %v1345
        %v1378 = vunpack.c.l.b16 %v1346
        %v1379 = vpack.c.b16 %v1364, %v1363
        %v1380 = vpack.c.b16 %v1366, %v1365
        %v1381 = vpack.c.b16 %v1368, %v1367
        %v1382 = vpack.c.b16 %v1370, %v1369
        %v1383 = vpack.c.b16 %v1372, %v1371
        %v1384 = vpack.c.b16 %v1374, %v1373
        %v1385 = vpack.c.b16 %v1376, %v1375
        %v1386 = vpack.c.b16 %v1378, %v1377
        %1395 = vmatprep.subr.bf16.mxu0 0
        %1396 = vmatpush1.bf16.msra.mxu0 %v1386
        %1397 = vmatprep.subr.bf16.mxu0 0
        %1398 = vmatpush1.bf16.msra.mxu0 %v1385
        %1399 = vmatprep.subr.bf16.mxu0 0
        %1400 = vmatpush1.bf16.msra.mxu0 %v1384
        %1401 = vmatprep.subr.bf16.mxu0 0
        %1402 = vmatpush1.bf16.msra.mxu0 %v1383
        %1403 = vmatprep.subr.bf16.mxu0 0
        %1404 = vmatpush1.bf16.msra.mxu0 %v1382
        %1405 = vmatprep.subr.bf16.mxu0 0
        %1406 = vmatpush1.bf16.msra.mxu0 %v1381
        %1407 = vmatprep.subr.bf16.mxu0 0
        %1408 = vmatpush1.bf16.msra.mxu0 %v1380
        %1409 = vmatprep.subr.bf16.mxu0 0
        %1410 = vmatpush1.bf16.msra.mxu0 %v1379
        %1411 = vmatprep.subr.bf16.mxu0 0
        %1412 = vmatpush2.bf16.msra.mxu0 0
        %1413 = vmatprep.subr.bf16.mxu0 0
        %1414 = vmatpush2.bf16.msra.mxu0 0
        %1415 = vmatprep.subr.bf16.mxu0 0
        %1416 = vmatpush2.bf16.msra.mxu0 0
        %1417 = vmatprep.subr.bf16.mxu0 0
        %1418 = vmatpush2.bf16.msra.mxu0 0
        %1419 = vmatprep.subr.bf16.mxu0 0
        %1420 = vmatpush2.bf16.msra.mxu0 0
        %1421 = vmatprep.subr.bf16.mxu0 0
        %1422 = vmatpush2.bf16.msra.mxu0 0
        %1423 = vmatprep.subr.bf16.mxu0 0
        %1424 = vmatpush2.bf16.msra.mxu0 0
        %1425 = vmatprep.subr.bf16.mxu0 0
        %1426 = vmatpush2.bf16.msra.mxu0 0
        %1427 = vmatprep.mubr.bf16.mxu0 0
        %1428 = vmatmul.mubr.bf16.gmra.mxu0 %v1003
        %v1429 = vpop.f32.mrf.mxu0
        %v1430 = vadd.f32 0.0, %v1429
        %v1431 = vpop.f32.mrf.mxu0
        %v1432 = vpop.f32.mrf.mxu0
        %v1433 = vadd.f32 0.0, %v1432
        %v1434 = vpop.f32.mrf.mxu0
        %1435 = vmatprep.mubr.bf16.mxu0 0
        %1436 = vmatmul.mubr.bf16.gmra.mxu0 %v1004
        %v1437 = vpop.f32.mrf.mxu0
        %v1438 = vadd.f32 0.0, %v1437
        %v1439 = vpop.f32.mrf.mxu0
        %v1440 = vpop.f32.mrf.mxu0
        %v1441 = vadd.f32 0.0, %v1440
        %v1442 = vpop.f32.mrf.mxu0
        %1443 = vmatprep.mubr.bf16.mxu0 0
        %1444 = vmatmul.mubr.bf16.gmra.mxu0 %v1005
        %v1445 = vpop.f32.mrf.mxu0
        %v1446 = vadd.f32 0.0, %v1445
        %v1447 = vpop.f32.mrf.mxu0
        %v1448 = vpop.f32.mrf.mxu0
        %v1449 = vadd.f32 0.0, %v1448
        %v1450 = vpop.f32.mrf.mxu0
        %1451 = vmatprep.mubr.bf16.mxu0 0
        %1452 = vmatmul.mubr.bf16.gmra.mxu0 %v1006
        %v1453 = vpop.f32.mrf.mxu0
        %v1454 = vadd.f32 0.0, %v1453
        %v1455 = vpop.f32.mrf.mxu0
        %v1456 = vpop.f32.mrf.mxu0
        %v1457 = vadd.f32 0.0, %v1456
        %v1458 = vpop.f32.mrf.mxu0
        %1459 = vmatprep.mubr.bf16.mxu0 0
        %1460 = vmatmul.mubr.bf16.gmra.mxu0 %v1007
        %v1461 = vpop.f32.mrf.mxu0
        %v1462 = vadd.f32 0.0, %v1461
        %v1463 = vpop.f32.mrf.mxu0
        %v1464 = vpop.f32.mrf.mxu0
        %v1465 = vadd.f32 0.0, %v1464
        %v1466 = vpop.f32.mrf.mxu0
        %1467 = vmatprep.mubr.bf16.mxu0 0
        %1468 = vmatmul.mubr.bf16.gmra.mxu0 %v1008
        %v1469 = vpop.f32.mrf.mxu0
        %v1470 = vadd.f32 0.0, %v1469
        %v1471 = vpop.f32.mrf.mxu0
        %v1472 = vpop.f32.mrf.mxu0
        %v1473 = vadd.f32 0.0, %v1472
        %v1474 = vpop.f32.mrf.mxu0
        %1475 = vmatprep.mubr.bf16.mxu0 0
        %1476 = vmatmul.mubr.bf16.gmra.mxu0 %v1009
        %v1477 = vpop.f32.mrf.mxu0
        %v1478 = vadd.f32 0.0, %v1477
        %v1479 = vpop.f32.mrf.mxu0
        %v1480 = vpop.f32.mrf.mxu0
        %v1481 = vadd.f32 0.0, %v1480
        %v1482 = vpop.f32.mrf.mxu0
        %1483 = vmatprep.mubr.bf16.mxu0 0
        %1484 = vmatmul.mubr.bf16.gmra.mxu0 %v1010
        %v1485 = vpop.f32.mrf.mxu0
        %v1486 = vadd.f32 0.0, %v1485
        %v1487 = vpop.f32.mrf.mxu0
        %v1488 = vpop.f32.mrf.mxu0
        %v1489 = vadd.f32 0.0, %v1488
        %v1490 = vpop.f32.mrf.mxu0
        %1491 = vdwg.mxu0
        %v1492 = vpack.c.bf16 %v1433, %v1430
        %v1493 = vpack.c.bf16 %v1441, %v1438
        %v1494 = vpack.c.bf16 %v1449, %v1446
        %v1495 = vpack.c.bf16 %v1457, %v1454
        %v1496 = vpack.c.bf16 %v1465, %v1462
        %v1497 = vpack.c.bf16 %v1473, %v1470
        %v1498 = vpack.c.bf16 %v1481, %v1478
        %v1499 = vpack.c.bf16 %v1489, %v1486
        %v1508 = vunpack.c.l.b16 %v1492
        %v1509 = vunpack.c.h.b16 %v1492
        %v1510 = vunpack.c.l.b16 %v1493
        %v1511 = vunpack.c.h.b16 %v1493
        %v1512 = vunpack.c.l.b16 %v1494
        %v1513 = vunpack.c.h.b16 %v1494
        %v1514 = vunpack.c.l.b16 %v1495
        %v1515 = vunpack.c.h.b16 %v1495
        %v1516 = vunpack.c.l.b16 %v1496
        %v1517 = vunpack.c.h.b16 %v1496
        %v1518 = vunpack.c.l.b16 %v1497
        %v1519 = vunpack.c.h.b16 %v1497
        %v1520 = vunpack.c.l.b16 %v1498
        %v1521 = vunpack.c.h.b16 %v1498
        %v1522 = vunpack.c.l.b16 %v1499
        %v1523 = vunpack.c.h.b16 %v1499
        %v1524 = vpack.c.b16 %v1508, %v1508
        %v1525 = vpack.c.b16 %v1509, %v1509
        %v1526 = vpack.c.b16 %v1510, %v1510
        %v1527 = vpack.c.b16 %v1511, %v1511
        %v1528 = vpack.c.b16 %v1512, %v1512
        %v1529 = vpack.c.b16 %v1513, %v1513
        %v1530 = vpack.c.b16 %v1514, %v1514
        %v1531 = vpack.c.b16 %v1515, %v1515
        %v1532 = vpack.c.b16 %v1516, %v1516
        %v1533 = vpack.c.b16 %v1517, %v1517
        %v1534 = vpack.c.b16 %v1518, %v1518
        %v1535 = vpack.c.b16 %v1519, %v1519
        %v1536 = vpack.c.b16 %v1520, %v1520
        %v1537 = vpack.c.b16 %v1521, %v1521
        %v1538 = vpack.c.b16 %v1522, %v1522
        %v1539 = vpack.c.b16 %v1523, %v1523
        %1556 = vst [vmem:[%s556] sm:$0xf] %v1524
        %1557 = vst [vmem:[%s556 + $0x4] sm:$0xf] %v1525
        %1558 = vst [vmem:[%s556 + $0x8] sm:$0xf] %v1526
        %1559 = vst [vmem:[%s556 + $0xc] sm:$0xf] %v1527
        %1560 = vst [vmem:[%s556 + $0x10] sm:$0xf] %v1528
        %1561 = vst [vmem:[%s556 + $0x14] sm:$0xf] %v1529
        %1562 = vst [vmem:[%s556 + $0x18] sm:$0xf] %v1530
        %1563 = vst [vmem:[%s556 + $0x1c] sm:$0xf] %v1531
        %1564 = vst [vmem:[%s556 + $0x20] sm:$0xf] %v1532
        %1565 = vst [vmem:[%s556 + $0x24] sm:$0xf] %v1533
        %1566 = vst [vmem:[%s556 + $0x28] sm:$0xf] %v1534
        %1567 = vst [vmem:[%s556 + $0x2c] sm:$0xf] %v1535
        %1568 = vst [vmem:[%s556 + $0x30] sm:$0xf] %v1536
        %1569 = vst [vmem:[%s556 + $0x34] sm:$0xf] %v1537
        %1570 = vst [vmem:[%s556 + $0x38] sm:$0xf] %v1538
        %1571 = vst [vmem:[%s556 + $0x3c] sm:$0xf] %v1539
        %v1572 = vld [vmem:[#allocation8] sm:$0xf]
        %v1573 = vld [vmem:[#allocation8 + $0x4] sm:$0xf]
        %v1574 = vld [vmem:[#allocation8 + $0x8] sm:$0xf]
        %v1575 = vld [vmem:[#allocation8 + $0xc] sm:$0xf]
        %v1576 = vld [vmem:[#allocation8 + $0x10] sm:$0xf]
        %v1577 = vld [vmem:[#allocation8 + $0x14] sm:$0xf]
        %v1578 = vld [vmem:[#allocation8 + $0x18] sm:$0xf]
        %v1579 = vld [vmem:[#allocation8 + $0x1c] sm:$0xf]
        %v1580 = vld [vmem:[#allocation8 + $0x20] sm:$0xf]
        %v1581 = vld [vmem:[#allocation8 + $0x24] sm:$0xf]
        %v1582 = vld [vmem:[#allocation8 + $0x28] sm:$0xf]
        %v1583 = vld [vmem:[#allocation8 + $0x2c] sm:$0xf]
        %v1584 = vld [vmem:[#allocation8 + $0x30] sm:$0xf]
        %v1585 = vld [vmem:[#allocation8 + $0x34] sm:$0xf]
        %v1586 = vld [vmem:[#allocation8 + $0x38] sm:$0xf]
        %v1587 = vld [vmem:[#allocation8 + $0x3c] sm:$0xf]
        %v1604 = vunpack.c.l.b16 %v1572
        %v1605 = vunpack.c.l.b16 %v1573
        %v1606 = vunpack.c.l.b16 %v1574
        %v1607 = vunpack.c.l.b16 %v1575
        %v1608 = vunpack.c.l.b16 %v1576
        %v1609 = vunpack.c.l.b16 %v1577
        %v1610 = vunpack.c.l.b16 %v1578
        %v1611 = vunpack.c.l.b16 %v1579
        %v1612 = vunpack.c.l.b16 %v1580
        %v1613 = vunpack.c.l.b16 %v1581
        %v1614 = vunpack.c.l.b16 %v1582
        %v1615 = vunpack.c.l.b16 %v1583
        %v1616 = vunpack.c.l.b16 %v1584
        %v1617 = vunpack.c.l.b16 %v1585
        %v1618 = vunpack.c.l.b16 %v1586
        %v1619 = vunpack.c.l.b16 %v1587
        %v1620 = vpack.c.b16 %v1605, %v1604
        %v1621 = vpack.c.b16 %v1607, %v1606
        %v1622 = vpack.c.b16 %v1609, %v1608
        %v1623 = vpack.c.b16 %v1611, %v1610
        %v1624 = vpack.c.b16 %v1613, %v1612
        %v1625 = vpack.c.b16 %v1615, %v1614
        %v1626 = vpack.c.b16 %v1617, %v1616
        %v1627 = vpack.c.b16 %v1619, %v1618
        %1636 = vmatprep.subr.bf16.mxu0 0
        %1637 = vmatpush1.bf16.msra.mxu0 %v1627
        %1638 = vmatprep.subr.bf16.mxu0 0
        %1639 = vmatpush1.bf16.msra.mxu0 %v1626
        %1640 = vmatprep.subr.bf16.mxu0 0
        %1641 = vmatpush1.bf16.msra.mxu0 %v1625
        %1642 = vmatprep.subr.bf16.mxu0 0
        %1643 = vmatpush1.bf16.msra.mxu0 %v1624
        %1644 = vmatprep.subr.bf16.mxu0 0
        %1645 = vmatpush1.bf16.msra.mxu0 %v1623
        %1646 = vmatprep.subr.bf16.mxu0 0
        %1647 = vmatpush1.bf16.msra.mxu0 %v1622
        %1648 = vmatprep.subr.bf16.mxu0 0
        %1649 = vmatpush1.bf16.msra.mxu0 %v1621
        %1650 = vmatprep.subr.bf16.mxu0 0
        %1651 = vmatpush1.bf16.msra.mxu0 %v1620
        %1652 = vmatprep.subr.bf16.mxu0 0
        %1653 = vmatpush2.bf16.msra.mxu0 0
        %1654 = vmatprep.subr.bf16.mxu0 0
        %1655 = vmatpush2.bf16.msra.mxu0 0
        %1656 = vmatprep.subr.bf16.mxu0 0
        %1657 = vmatpush2.bf16.msra.mxu0 0
        %1658 = vmatprep.subr.bf16.mxu0 0
        %1659 = vmatpush2.bf16.msra.mxu0 0
        %1660 = vmatprep.subr.bf16.mxu0 0
        %1661 = vmatpush2.bf16.msra.mxu0 0
        %1662 = vmatprep.subr.bf16.mxu0 0
        %1663 = vmatpush2.bf16.msra.mxu0 0
        %1664 = vmatprep.subr.bf16.mxu0 0
        %1665 = vmatpush2.bf16.msra.mxu0 0
        %1666 = vmatprep.subr.bf16.mxu0 0
        %1667 = vmatpush2.bf16.msra.mxu0 0
        %1668 = vmatprep.mubr.bf16.mxu0 0
        %1669 = vmatmul.mubr.bf16.gmra.mxu0 %v995
        %v1670 = vpop.f32.mrf.mxu0
        %v1671 = vadd.f32 0.0, %v1670
        %v1672 = vpop.f32.mrf.mxu0
        %v1673 = vpop.f32.mrf.mxu0
        %v1674 = vadd.f32 0.0, %v1673
        %v1675 = vpop.f32.mrf.mxu0
        %1676 = vmatprep.mubr.bf16.mxu0 0
        %1677 = vmatmul.mubr.bf16.gmra.mxu0 %v996
        %v1678 = vpop.f32.mrf.mxu0
        %v1679 = vadd.f32 0.0, %v1678
        %v1680 = vpop.f32.mrf.mxu0
        %v1681 = vpop.f32.mrf.mxu0
        %v1682 = vadd.f32 0.0, %v1681
        %v1683 = vpop.f32.mrf.mxu0
        %1684 = vmatprep.mubr.bf16.mxu0 0
        %1685 = vmatmul.mubr.bf16.gmra.mxu0 %v997
        %v1686 = vpop.f32.mrf.mxu0
        %v1687 = vadd.f32 0.0, %v1686
        %v1688 = vpop.f32.mrf.mxu0
        %v1689 = vpop.f32.mrf.mxu0
        %v1690 = vadd.f32 0.0, %v1689
        %v1691 = vpop.f32.mrf.mxu0
        %1692 = vmatprep.mubr.bf16.mxu0 0
        %1693 = vmatmul.mubr.bf16.gmra.mxu0 %v998
        %v1694 = vpop.f32.mrf.mxu0
        %v1695 = vadd.f32 0.0, %v1694
        %v1696 = vpop.f32.mrf.mxu0
        %v1697 = vpop.f32.mrf.mxu0
        %v1698 = vadd.f32 0.0, %v1697
        %v1699 = vpop.f32.mrf.mxu0
        %1700 = vmatprep.mubr.bf16.mxu0 0
        %1701 = vmatmul.mubr.bf16.gmra.mxu0 %v999
        %v1702 = vpop.f32.mrf.mxu0
        %v1703 = vadd.f32 0.0, %v1702
        %v1704 = vpop.f32.mrf.mxu0
        %v1705 = vpop.f32.mrf.mxu0
        %v1706 = vadd.f32 0.0, %v1705
        %v1707 = vpop.f32.mrf.mxu0
        %1708 = vmatprep.mubr.bf16.mxu0 0
        %1709 = vmatmul.mubr.bf16.gmra.mxu0 %v1000
        %v1710 = vpop.f32.mrf.mxu0
        %v1711 = vadd.f32 0.0, %v1710
        %v1712 = vpop.f32.mrf.mxu0
        %v1713 = vpop.f32.mrf.mxu0
        %v1714 = vadd.f32 0.0, %v1713
        %v1715 = vpop.f32.mrf.mxu0
        %1716 = vmatprep.mubr.bf16.mxu0 0
        %1717 = vmatmul.mubr.bf16.gmra.mxu0 %v1001
        %v1718 = vpop.f32.mrf.mxu0
        %v1719 = vadd.f32 0.0, %v1718
        %v1720 = vpop.f32.mrf.mxu0
        %v1721 = vpop.f32.mrf.mxu0
        %v1722 = vadd.f32 0.0, %v1721
        %v1723 = vpop.f32.mrf.mxu0
        %1724 = vmatprep.mubr.bf16.mxu0 0
        %1725 = vmatmul.mubr.bf16.gmra.mxu0 %v1002
        %v1726 = vpop.f32.mrf.mxu0
        %v1727 = vadd.f32 0.0, %v1726
        %v1728 = vpop.f32.mrf.mxu0
        %v1729 = vpop.f32.mrf.mxu0
        %v1730 = vadd.f32 0.0, %v1729
        %v1731 = vpop.f32.mrf.mxu0
        %1732 = vdwg.mxu0
        %v1733 = vpack.c.bf16 %v1674, %v1671
        %v1734 = vpack.c.bf16 %v1682, %v1679
        %v1735 = vpack.c.bf16 %v1690, %v1687
        %v1736 = vpack.c.bf16 %v1698, %v1695
        %v1737 = vpack.c.bf16 %v1706, %v1703
        %v1738 = vpack.c.bf16 %v1714, %v1711
        %v1739 = vpack.c.bf16 %v1722, %v1719
        %v1740 = vpack.c.bf16 %v1730, %v1727
        %v1749 = vunpack.c.l.b16 %v1733
        %v1750 = vunpack.c.h.b16 %v1733
        %v1751 = vunpack.c.l.b16 %v1734
        %v1752 = vunpack.c.h.b16 %v1734
        %v1753 = vunpack.c.l.b16 %v1735
        %v1754 = vunpack.c.h.b16 %v1735
        %v1755 = vunpack.c.l.b16 %v1736
        %v1756 = vunpack.c.h.b16 %v1736
        %v1757 = vunpack.c.l.b16 %v1737
        %v1758 = vunpack.c.h.b16 %v1737
        %v1759 = vunpack.c.l.b16 %v1738
        %v1760 = vunpack.c.h.b16 %v1738
        %v1761 = vunpack.c.l.b16 %v1739
        %v1762 = vunpack.c.h.b16 %v1739
        %v1763 = vunpack.c.l.b16 %v1740
        %v1764 = vunpack.c.h.b16 %v1740
        %v1765 = vpack.c.b16 %v1749, %v1749
        %v1766 = vpack.c.b16 %v1750, %v1750
        %v1767 = vpack.c.b16 %v1751, %v1751
        %v1768 = vpack.c.b16 %v1752, %v1752
        %v1769 = vpack.c.b16 %v1753, %v1753
        %v1770 = vpack.c.b16 %v1754, %v1754
        %v1771 = vpack.c.b16 %v1755, %v1755
        %v1772 = vpack.c.b16 %v1756, %v1756
        %v1773 = vpack.c.b16 %v1757, %v1757
        %v1774 = vpack.c.b16 %v1758, %v1758
        %v1775 = vpack.c.b16 %v1759, %v1759
        %v1776 = vpack.c.b16 %v1760, %v1760
        %v1777 = vpack.c.b16 %v1761, %v1761
        %v1778 = vpack.c.b16 %v1762, %v1762
        %v1779 = vpack.c.b16 %v1763, %v1763
        %v1780 = vpack.c.b16 %v1764, %v1764
        %1797 = vst [vmem:[%s535] sm:$0xf] %v1765
        %1798 = vst [vmem:[%s535 + $0x4] sm:$0xf] %v1766
        %1799 = vst [vmem:[%s535 + $0x8] sm:$0xf] %v1767
        %1800 = vst [vmem:[%s535 + $0xc] sm:$0xf] %v1768
        %1801 = vst [vmem:[%s535 + $0x10] sm:$0xf] %v1769
        %1802 = vst [vmem:[%s535 + $0x14] sm:$0xf] %v1770
        %1803 = vst [vmem:[%s535 + $0x18] sm:$0xf] %v1771
        %1804 = vst [vmem:[%s535 + $0x1c] sm:$0xf] %v1772
        %1805 = vst [vmem:[%s535 + $0x20] sm:$0xf] %v1773
        %1806 = vst [vmem:[%s535 + $0x24] sm:$0xf] %v1774
        %1807 = vst [vmem:[%s535 + $0x28] sm:$0xf] %v1775
        %1808 = vst [vmem:[%s535 + $0x2c] sm:$0xf] %v1776
        %1809 = vst [vmem:[%s535 + $0x30] sm:$0xf] %v1777
        %1810 = vst [vmem:[%s535 + $0x34] sm:$0xf] %v1778
        %1811 = vst [vmem:[%s535 + $0x38] sm:$0xf] %v1779
        %1812 = vst [vmem:[%s535 + $0x3c] sm:$0xf] %v1780
        %s1813 = scalar_lea.vmem [#allocation8], 64
        %v1814 = vld [vmem:[%s1813] sm:$0xf]
        %v1815 = vld [vmem:[%s1813 + $0x4] sm:$0xf]
        %v1816 = vld [vmem:[%s1813 + $0x8] sm:$0xf]
        %v1817 = vld [vmem:[%s1813 + $0xc] sm:$0xf]
        %v1818 = vld [vmem:[%s1813 + $0x10] sm:$0xf]
        %v1819 = vld [vmem:[%s1813 + $0x14] sm:$0xf]
        %v1820 = vld [vmem:[%s1813 + $0x18] sm:$0xf]
        %v1821 = vld [vmem:[%s1813 + $0x1c] sm:$0xf]
        %v1822 = vld [vmem:[%s1813 + $0x20] sm:$0xf]
        %v1823 = vld [vmem:[%s1813 + $0x24] sm:$0xf]
        %v1824 = vld [vmem:[%s1813 + $0x28] sm:$0xf]
        %v1825 = vld [vmem:[%s1813 + $0x2c] sm:$0xf]
        %v1826 = vld [vmem:[%s1813 + $0x30] sm:$0xf]
        %v1827 = vld [vmem:[%s1813 + $0x34] sm:$0xf]
        %v1828 = vld [vmem:[%s1813 + $0x38] sm:$0xf]
        %v1829 = vld [vmem:[%s1813 + $0x3c] sm:$0xf]
        %v1846 = vunpack.c.l.b16 %v1814
        %v1847 = vunpack.c.l.b16 %v1815
        %v1848 = vunpack.c.l.b16 %v1816
        %v1849 = vunpack.c.l.b16 %v1817
        %v1850 = vunpack.c.l.b16 %v1818
        %v1851 = vunpack.c.l.b16 %v1819
        %v1852 = vunpack.c.l.b16 %v1820
        %v1853 = vunpack.c.l.b16 %v1821
        %v1854 = vunpack.c.l.b16 %v1822
        %v1855 = vunpack.c.l.b16 %v1823
        %v1856 = vunpack.c.l.b16 %v1824
        %v1857 = vunpack.c.l.b16 %v1825
        %v1858 = vunpack.c.l.b16 %v1826
        %v1859 = vunpack.c.l.b16 %v1827
        %v1860 = vunpack.c.l.b16 %v1828
        %v1861 = vunpack.c.l.b16 %v1829
        %v1862 = vpack.c.b16 %v1847, %v1846
        %v1863 = vpack.c.b16 %v1849, %v1848
        %v1864 = vpack.c.b16 %v1851, %v1850
        %v1865 = vpack.c.b16 %v1853, %v1852
        %v1866 = vpack.c.b16 %v1855, %v1854
        %v1867 = vpack.c.b16 %v1857, %v1856
        %v1868 = vpack.c.b16 %v1859, %v1858
        %v1869 = vpack.c.b16 %v1861, %v1860
        %1878 = vmatprep.subr.bf16.mxu0 0
        %1879 = vmatpush1.bf16.msra.mxu0 %v1869
        %1880 = vmatprep.subr.bf16.mxu0 0
        %1881 = vmatpush1.bf16.msra.mxu0 %v1868
        %1882 = vmatprep.subr.bf16.mxu0 0
        %1883 = vmatpush1.bf16.msra.mxu0 %v1867
        %1884 = vmatprep.subr.bf16.mxu0 0
        %1885 = vmatpush1.bf16.msra.mxu0 %v1866
        %1886 = vmatprep.subr.bf16.mxu0 0
        %1887 = vmatpush1.bf16.msra.mxu0 %v1865
        %1888 = vmatprep.subr.bf16.mxu0 0
        %1889 = vmatpush1.bf16.msra.mxu0 %v1864
        %1890 = vmatprep.subr.bf16.mxu0 0
        %1891 = vmatpush1.bf16.msra.mxu0 %v1863
        %1892 = vmatprep.subr.bf16.mxu0 0
        %1893 = vmatpush1.bf16.msra.mxu0 %v1862
        %1894 = vmatprep.subr.bf16.mxu0 0
        %1895 = vmatpush2.bf16.msra.mxu0 0
        %1896 = vmatprep.subr.bf16.mxu0 0
        %1897 = vmatpush2.bf16.msra.mxu0 0
        %1898 = vmatprep.subr.bf16.mxu0 0
        %1899 = vmatpush2.bf16.msra.mxu0 0
        %1900 = vmatprep.subr.bf16.mxu0 0
        %1901 = vmatpush2.bf16.msra.mxu0 0
        %1902 = vmatprep.subr.bf16.mxu0 0
        %1903 = vmatpush2.bf16.msra.mxu0 0
        %1904 = vmatprep.subr.bf16.mxu0 0
        %1905 = vmatpush2.bf16.msra.mxu0 0
        %1906 = vmatprep.subr.bf16.mxu0 0
        %1907 = vmatpush2.bf16.msra.mxu0 0
        %1908 = vmatprep.subr.bf16.mxu0 0
        %1909 = vmatpush2.bf16.msra.mxu0 0
        %1910 = vmatprep.mubr.bf16.mxu0 0
        %1911 = vmatmul.mubr.bf16.gmra.mxu0 %v995
        %v1912 = vpop.f32.mrf.mxu0
        %v1913 = vadd.f32 0.0, %v1912
        %v1914 = vpop.f32.mrf.mxu0
        %v1915 = vpop.f32.mrf.mxu0
        %v1916 = vadd.f32 0.0, %v1915
        %v1917 = vpop.f32.mrf.mxu0
        %1918 = vmatprep.mubr.bf16.mxu0 0
        %1919 = vmatmul.mubr.bf16.gmra.mxu0 %v996
        %v1920 = vpop.f32.mrf.mxu0
        %v1921 = vadd.f32 0.0, %v1920
        %v1922 = vpop.f32.mrf.mxu0
        %v1923 = vpop.f32.mrf.mxu0
        %v1924 = vadd.f32 0.0, %v1923
        %v1925 = vpop.f32.mrf.mxu0
        %1926 = vmatprep.mubr.bf16.mxu0 0
        %1927 = vmatmul.mubr.bf16.gmra.mxu0 %v997
        %v1928 = vpop.f32.mrf.mxu0
        %v1929 = vadd.f32 0.0, %v1928
        %v1930 = vpop.f32.mrf.mxu0
        %v1931 = vpop.f32.mrf.mxu0
        %v1932 = vadd.f32 0.0, %v1931
        %v1933 = vpop.f32.mrf.mxu0
        %1934 = vmatprep.mubr.bf16.mxu0 0
        %1935 = vmatmul.mubr.bf16.gmra.mxu0 %v998
        %v1936 = vpop.f32.mrf.mxu0
        %v1937 = vadd.f32 0.0, %v1936
        %v1938 = vpop.f32.mrf.mxu0
        %v1939 = vpop.f32.mrf.mxu0
        %v1940 = vadd.f32 0.0, %v1939
        %v1941 = vpop.f32.mrf.mxu0
        %1942 = vmatprep.mubr.bf16.mxu0 0
        %1943 = vmatmul.mubr.bf16.gmra.mxu0 %v999
        %v1944 = vpop.f32.mrf.mxu0
        %v1945 = vadd.f32 0.0, %v1944
        %v1946 = vpop.f32.mrf.mxu0
        %v1947 = vpop.f32.mrf.mxu0
        %v1948 = vadd.f32 0.0, %v1947
        %v1949 = vpop.f32.mrf.mxu0
        %1950 = vmatprep.mubr.bf16.mxu0 0
        %1951 = vmatmul.mubr.bf16.gmra.mxu0 %v1000
        %v1952 = vpop.f32.mrf.mxu0
        %v1953 = vadd.f32 0.0, %v1952
        %v1954 = vpop.f32.mrf.mxu0
        %v1955 = vpop.f32.mrf.mxu0
        %v1956 = vadd.f32 0.0, %v1955
        %v1957 = vpop.f32.mrf.mxu0
        %1958 = vmatprep.mubr.bf16.mxu0 0
        %1959 = vmatmul.mubr.bf16.gmra.mxu0 %v1001
        %v1960 = vpop.f32.mrf.mxu0
        %v1961 = vadd.f32 0.0, %v1960
        %v1962 = vpop.f32.mrf.mxu0
        %v1963 = vpop.f32.mrf.mxu0
        %v1964 = vadd.f32 0.0, %v1963
        %v1965 = vpop.f32.mrf.mxu0
        %1966 = vmatprep.mubr.bf16.mxu0 0
        %1967 = vmatmul.mubr.bf16.gmra.mxu0 %v1002
        %v1968 = vpop.f32.mrf.mxu0
        %v1969 = vadd.f32 0.0, %v1968
        %v1970 = vpop.f32.mrf.mxu0
        %v1971 = vpop.f32.mrf.mxu0
        %v1972 = vadd.f32 0.0, %v1971
        %v1973 = vpop.f32.mrf.mxu0
        %1974 = vdwg.mxu0
        %v1975 = vpack.c.bf16 %v1916, %v1913
        %v1976 = vpack.c.bf16 %v1924, %v1921
        %v1977 = vpack.c.bf16 %v1932, %v1929
        %v1978 = vpack.c.bf16 %v1940, %v1937
        %v1979 = vpack.c.bf16 %v1948, %v1945
        %v1980 = vpack.c.bf16 %v1956, %v1953
        %v1981 = vpack.c.bf16 %v1964, %v1961
        %v1982 = vpack.c.bf16 %v1972, %v1969
        %v1991 = vunpack.c.l.b16 %v1975
        %v1992 = vunpack.c.h.b16 %v1975
        %v1993 = vunpack.c.l.b16 %v1976
        %v1994 = vunpack.c.h.b16 %v1976
        %v1995 = vunpack.c.l.b16 %v1977
        %v1996 = vunpack.c.h.b16 %v1977
        %v1997 = vunpack.c.l.b16 %v1978
        %v1998 = vunpack.c.h.b16 %v1978
        %v1999 = vunpack.c.l.b16 %v1979
        %v2000 = vunpack.c.h.b16 %v1979
        %v2001 = vunpack.c.l.b16 %v1980
        %v2002 = vunpack.c.h.b16 %v1980
        %v2003 = vunpack.c.l.b16 %v1981
        %v2004 = vunpack.c.h.b16 %v1981
        %v2005 = vunpack.c.l.b16 %v1982
        %v2006 = vunpack.c.h.b16 %v1982
        %v2007 = vpack.c.b16 %v1991, %v1991
        %v2008 = vpack.c.b16 %v1992, %v1992
        %v2009 = vpack.c.b16 %v1993, %v1993
        %v2010 = vpack.c.b16 %v1994, %v1994
        %v2011 = vpack.c.b16 %v1995, %v1995
        %v2012 = vpack.c.b16 %v1996, %v1996
        %v2013 = vpack.c.b16 %v1997, %v1997
        %v2014 = vpack.c.b16 %v1998, %v1998
        %v2015 = vpack.c.b16 %v1999, %v1999
        %v2016 = vpack.c.b16 %v2000, %v2000
        %v2017 = vpack.c.b16 %v2001, %v2001
        %v2018 = vpack.c.b16 %v2002, %v2002
        %v2019 = vpack.c.b16 %v2003, %v2003
        %v2020 = vpack.c.b16 %v2004, %v2004
        %v2021 = vpack.c.b16 %v2005, %v2005
        %v2022 = vpack.c.b16 %v2006, %v2006
        %s2039 = scalar_lea.vmem %s535, 64 [#allocation13]
        %2040 = vst [vmem:[%s2039] sm:$0xf] %v2007
        %2041 = vst [vmem:[%s2039 + $0x4] sm:$0xf] %v2008
        %2042 = vst [vmem:[%s2039 + $0x8] sm:$0xf] %v2009
        %2043 = vst [vmem:[%s2039 + $0xc] sm:$0xf] %v2010
        %2044 = vst [vmem:[%s2039 + $0x10] sm:$0xf] %v2011
        %2045 = vst [vmem:[%s2039 + $0x14] sm:$0xf] %v2012
        %2046 = vst [vmem:[%s2039 + $0x18] sm:$0xf] %v2013
        %2047 = vst [vmem:[%s2039 + $0x1c] sm:$0xf] %v2014
        %2048 = vst [vmem:[%s2039 + $0x20] sm:$0xf] %v2015
        %2049 = vst [vmem:[%s2039 + $0x24] sm:$0xf] %v2016
        %2050 = vst [vmem:[%s2039 + $0x28] sm:$0xf] %v2017
        %2051 = vst [vmem:[%s2039 + $0x2c] sm:$0xf] %v2018
        %2052 = vst [vmem:[%s2039 + $0x30] sm:$0xf] %v2019
        %2053 = vst [vmem:[%s2039 + $0x34] sm:$0xf] %v2020
        %2054 = vst [vmem:[%s2039 + $0x38] sm:$0xf] %v2021
        %2055 = vst [vmem:[%s2039 + $0x3c] sm:$0xf] %v2022
        %s2056 = scalar_lea.vmem [#allocation8], 128
        %v2057 = vld [vmem:[%s2056] sm:$0xf]
        %v2058 = vld [vmem:[%s2056 + $0x4] sm:$0xf]
        %v2059 = vld [vmem:[%s2056 + $0x8] sm:$0xf]
        %v2060 = vld [vmem:[%s2056 + $0xc] sm:$0xf]
        %v2061 = vld [vmem:[%s2056 + $0x10] sm:$0xf]
        %v2062 = vld [vmem:[%s2056 + $0x14] sm:$0xf]
        %v2063 = vld [vmem:[%s2056 + $0x18] sm:$0xf]
        %v2064 = vld [vmem:[%s2056 + $0x1c] sm:$0xf]
        %v2065 = vld [vmem:[%s2056 + $0x20] sm:$0xf]
        %v2066 = vld [vmem:[%s2056 + $0x24] sm:$0xf]
        %v2067 = vld [vmem:[%s2056 + $0x28] sm:$0xf]
        %v2068 = vld [vmem:[%s2056 + $0x2c] sm:$0xf]
        %v2069 = vld [vmem:[%s2056 + $0x30] sm:$0xf]
        %v2070 = vld [vmem:[%s2056 + $0x34] sm:$0xf]
        %v2071 = vld [vmem:[%s2056 + $0x38] sm:$0xf]
        %v2072 = vld [vmem:[%s2056 + $0x3c] sm:$0xf]
        %v2089 = vunpack.c.l.b16 %v2057
        %v2090 = vunpack.c.l.b16 %v2058
        %v2091 = vunpack.c.l.b16 %v2059
        %v2092 = vunpack.c.l.b16 %v2060
        %v2093 = vunpack.c.l.b16 %v2061
        %v2094 = vunpack.c.l.b16 %v2062
        %v2095 = vunpack.c.l.b16 %v2063
        %v2096 = vunpack.c.l.b16 %v2064
        %v2097 = vunpack.c.l.b16 %v2065
        %v2098 = vunpack.c.l.b16 %v2066
        %v2099 = vunpack.c.l.b16 %v2067
        %v2100 = vunpack.c.l.b16 %v2068
        %v2101 = vunpack.c.l.b16 %v2069
        %v2102 = vunpack.c.l.b16 %v2070
        %v2103 = vunpack.c.l.b16 %v2071
        %v2104 = vunpack.c.l.b16 %v2072
        %v2105 = vpack.c.b16 %v2090, %v2089
        %v2106 = vpack.c.b16 %v2092, %v2091
        %v2107 = vpack.c.b16 %v2094, %v2093
        %v2108 = vpack.c.b16 %v2096, %v2095
        %v2109 = vpack.c.b16 %v2098, %v2097
        %v2110 = vpack.c.b16 %v2100, %v2099
        %v2111 = vpack.c.b16 %v2102, %v2101
        %v2112 = vpack.c.b16 %v2104, %v2103
        %2121 = vmatprep.subr.bf16.mxu0 0
        %2122 = vmatpush1.bf16.msra.mxu0 %v2112
        %2123 = vmatprep.subr.bf16.mxu0 0
        %2124 = vmatpush1.bf16.msra.mxu0 %v2111
        %2125 = vmatprep.subr.bf16.mxu0 0
        %2126 = vmatpush1.bf16.msra.mxu0 %v2110
        %2127 = vmatprep.subr.bf16.mxu0 0
        %2128 = vmatpush1.bf16.msra.mxu0 %v2109
        %2129 = vmatprep.subr.bf16.mxu0 0
        %2130 = vmatpush1.bf16.msra.mxu0 %v2108
        %2131 = vmatprep.subr.bf16.mxu0 0
        %2132 = vmatpush1.bf16.msra.mxu0 %v2107
        %2133 = vmatprep.subr.bf16.mxu0 0
        %2134 = vmatpush1.bf16.msra.mxu0 %v2106
        %2135 = vmatprep.subr.bf16.mxu0 0
        %2136 = vmatpush1.bf16.msra.mxu0 %v2105
        %2137 = vmatprep.subr.bf16.mxu0 0
        %2138 = vmatpush2.bf16.msra.mxu0 0
        %2139 = vmatprep.subr.bf16.mxu0 0
        %2140 = vmatpush2.bf16.msra.mxu0 0
        %2141 = vmatprep.subr.bf16.mxu0 0
        %2142 = vmatpush2.bf16.msra.mxu0 0
        %2143 = vmatprep.subr.bf16.mxu0 0
        %2144 = vmatpush2.bf16.msra.mxu0 0
        %2145 = vmatprep.subr.bf16.mxu0 0
        %2146 = vmatpush2.bf16.msra.mxu0 0
        %2147 = vmatprep.subr.bf16.mxu0 0
        %2148 = vmatpush2.bf16.msra.mxu0 0
        %2149 = vmatprep.subr.bf16.mxu0 0
        %2150 = vmatpush2.bf16.msra.mxu0 0
        %2151 = vmatprep.subr.bf16.mxu0 0
        %2152 = vmatpush2.bf16.msra.mxu0 0
        %2153 = vmatprep.mubr.bf16.mxu0 0
        %2154 = vmatmul.mubr.bf16.gmra.mxu0 %v995
        %v2155 = vpop.f32.mrf.mxu0
        %v2156 = vadd.f32 0.0, %v2155
        %v2157 = vpop.f32.mrf.mxu0
        %v2158 = vpop.f32.mrf.mxu0
        %v2159 = vadd.f32 0.0, %v2158
        %v2160 = vpop.f32.mrf.mxu0
        %2161 = vmatprep.mubr.bf16.mxu0 0
        %2162 = vmatmul.mubr.bf16.gmra.mxu0 %v996
        %v2163 = vpop.f32.mrf.mxu0
        %v2164 = vadd.f32 0.0, %v2163
        %v2165 = vpop.f32.mrf.mxu0
        %v2166 = vpop.f32.mrf.mxu0
        %v2167 = vadd.f32 0.0, %v2166
        %v2168 = vpop.f32.mrf.mxu0
        %2169 = vmatprep.mubr.bf16.mxu0 0
        %2170 = vmatmul.mubr.bf16.gmra.mxu0 %v997
        %v2171 = vpop.f32.mrf.mxu0
        %v2172 = vadd.f32 0.0, %v2171
        %v2173 = vpop.f32.mrf.mxu0
        %v2174 = vpop.f32.mrf.mxu0
        %v2175 = vadd.f32 0.0, %v2174
        %v2176 = vpop.f32.mrf.mxu0
        %2177 = vmatprep.mubr.bf16.mxu0 0
        %2178 = vmatmul.mubr.bf16.gmra.mxu0 %v998
        %v2179 = vpop.f32.mrf.mxu0
        %v2180 = vadd.f32 0.0, %v2179
        %v2181 = vpop.f32.mrf.mxu0
        %v2182 = vpop.f32.mrf.mxu0
        %v2183 = vadd.f32 0.0, %v2182
        %v2184 = vpop.f32.mrf.mxu0
        %2185 = vmatprep.mubr.bf16.mxu0 0
        %2186 = vmatmul.mubr.bf16.gmra.mxu0 %v999
        %v2187 = vpop.f32.mrf.mxu0
        %v2188 = vadd.f32 0.0, %v2187
        %v2189 = vpop.f32.mrf.mxu0
        %v2190 = vpop.f32.mrf.mxu0
        %v2191 = vadd.f32 0.0, %v2190
        %v2192 = vpop.f32.mrf.mxu0
        %2193 = vmatprep.mubr.bf16.mxu0 0
        %2194 = vmatmul.mubr.bf16.gmra.mxu0 %v1000
        %v2195 = vpop.f32.mrf.mxu0
        %v2196 = vadd.f32 0.0, %v2195
        %v2197 = vpop.f32.mrf.mxu0
        %v2198 = vpop.f32.mrf.mxu0
        %v2199 = vadd.f32 0.0, %v2198
        %v2200 = vpop.f32.mrf.mxu0
        %2201 = vmatprep.mubr.bf16.mxu0 0
        %2202 = vmatmul.mubr.bf16.gmra.mxu0 %v1001
        %v2203 = vpop.f32.mrf.mxu0
        %v2204 = vadd.f32 0.0, %v2203
        %v2205 = vpop.f32.mrf.mxu0
        %v2206 = vpop.f32.mrf.mxu0
        %v2207 = vadd.f32 0.0, %v2206
        %v2208 = vpop.f32.mrf.mxu0
        %2209 = vmatprep.mubr.bf16.mxu0 0
        %2210 = vmatmul.mubr.bf16.gmra.mxu0 %v1002
        %v2211 = vpop.f32.mrf.mxu0
        %v2212 = vadd.f32 0.0, %v2211
        %v2213 = vpop.f32.mrf.mxu0
        %v2214 = vpop.f32.mrf.mxu0
        %v2215 = vadd.f32 0.0, %v2214
        %v2216 = vpop.f32.mrf.mxu0
        %2217 = vdwg.mxu0
        %v2218 = vpack.c.bf16 %v2159, %v2156
        %v2219 = vpack.c.bf16 %v2167, %v2164
        %v2220 = vpack.c.bf16 %v2175, %v2172
        %v2221 = vpack.c.bf16 %v2183, %v2180
        %v2222 = vpack.c.bf16 %v2191, %v2188
        %v2223 = vpack.c.bf16 %v2199, %v2196
        %v2224 = vpack.c.bf16 %v2207, %v2204
        %v2225 = vpack.c.bf16 %v2215, %v2212
        %v2234 = vunpack.c.l.b16 %v2218
        %v2235 = vunpack.c.h.b16 %v2218
        %v2236 = vunpack.c.l.b16 %v2219
        %v2237 = vunpack.c.h.b16 %v2219
        %v2238 = vunpack.c.l.b16 %v2220
        %v2239 = vunpack.c.h.b16 %v2220
        %v2240 = vunpack.c.l.b16 %v2221
        %v2241 = vunpack.c.h.b16 %v2221
        %v2242 = vunpack.c.l.b16 %v2222
        %v2243 = vunpack.c.h.b16 %v2222
        %v2244 = vunpack.c.l.b16 %v2223
        %v2245 = vunpack.c.h.b16 %v2223
        %v2246 = vunpack.c.l.b16 %v2224
        %v2247 = vunpack.c.h.b16 %v2224
        %v2248 = vunpack.c.l.b16 %v2225
        %v2249 = vunpack.c.h.b16 %v2225
        %v2250 = vpack.c.b16 %v2234, %v2234
        %v2251 = vpack.c.b16 %v2235, %v2235
        %v2252 = vpack.c.b16 %v2236, %v2236
        %v2253 = vpack.c.b16 %v2237, %v2237
        %v2254 = vpack.c.b16 %v2238, %v2238
        %v2255 = vpack.c.b16 %v2239, %v2239
        %v2256 = vpack.c.b16 %v2240, %v2240
        %v2257 = vpack.c.b16 %v2241, %v2241
        %v2258 = vpack.c.b16 %v2242, %v2242
        %v2259 = vpack.c.b16 %v2243, %v2243
        %v2260 = vpack.c.b16 %v2244, %v2244
        %v2261 = vpack.c.b16 %v2245, %v2245
        %v2262 = vpack.c.b16 %v2246, %v2246
        %v2263 = vpack.c.b16 %v2247, %v2247
        %v2264 = vpack.c.b16 %v2248, %v2248
        %v2265 = vpack.c.b16 %v2249, %v2249
        %s2282 = scalar_lea.vmem %s535, 128 [#allocation13]
        %2283 = vst [vmem:[%s2282] sm:$0xf] %v2250
        %2284 = vst [vmem:[%s2282 + $0x4] sm:$0xf] %v2251
        %2285 = vst [vmem:[%s2282 + $0x8] sm:$0xf] %v2252
        %2286 = vst [vmem:[%s2282 + $0xc] sm:$0xf] %v2253
        %2287 = vst [vmem:[%s2282 + $0x10] sm:$0xf] %v2254
        %2288 = vst [vmem:[%s2282 + $0x14] sm:$0xf] %v2255
        %2289 = vst [vmem:[%s2282 + $0x18] sm:$0xf] %v2256
        %2290 = vst [vmem:[%s2282 + $0x1c] sm:$0xf] %v2257
        %2291 = vst [vmem:[%s2282 + $0x20] sm:$0xf] %v2258
        %2292 = vst [vmem:[%s2282 + $0x24] sm:$0xf] %v2259
        %2293 = vst [vmem:[%s2282 + $0x28] sm:$0xf] %v2260
        %2294 = vst [vmem:[%s2282 + $0x2c] sm:$0xf] %v2261
        %2295 = vst [vmem:[%s2282 + $0x30] sm:$0xf] %v2262
        %2296 = vst [vmem:[%s2282 + $0x34] sm:$0xf] %v2263
        %2297 = vst [vmem:[%s2282 + $0x38] sm:$0xf] %v2264
        %2298 = vst [vmem:[%s2282 + $0x3c] sm:$0xf] %v2265
        %s2299 = scalar_lea.vmem [#allocation8], 192
        %v2300 = vld [vmem:[%s2299] sm:$0xf]
        %v2301 = vld [vmem:[%s2299 + $0x4] sm:$0xf]
        %v2302 = vld [vmem:[%s2299 + $0x8] sm:$0xf]
        %v2303 = vld [vmem:[%s2299 + $0xc] sm:$0xf]
        %v2304 = vld [vmem:[%s2299 + $0x10] sm:$0xf]
        %v2305 = vld [vmem:[%s2299 + $0x14] sm:$0xf]
        %v2306 = vld [vmem:[%s2299 + $0x18] sm:$0xf]
        %v2307 = vld [vmem:[%s2299 + $0x1c] sm:$0xf]
        %v2308 = vld [vmem:[%s2299 + $0x20] sm:$0xf]
        %v2309 = vld [vmem:[%s2299 + $0x24] sm:$0xf]
        %v2310 = vld [vmem:[%s2299 + $0x28] sm:$0xf]
        %v2311 = vld [vmem:[%s2299 + $0x2c] sm:$0xf]
        %v2312 = vld [vmem:[%s2299 + $0x30] sm:$0xf]
        %v2313 = vld [vmem:[%s2299 + $0x34] sm:$0xf]
        %v2314 = vld [vmem:[%s2299 + $0x38] sm:$0xf]
        %v2315 = vld [vmem:[%s2299 + $0x3c] sm:$0xf]
        %v2332 = vunpack.c.l.b16 %v2300
        %v2333 = vunpack.c.l.b16 %v2301
        %v2334 = vunpack.c.l.b16 %v2302
        %v2335 = vunpack.c.l.b16 %v2303
        %v2336 = vunpack.c.l.b16 %v2304
        %v2337 = vunpack.c.l.b16 %v2305
        %v2338 = vunpack.c.l.b16 %v2306
        %v2339 = vunpack.c.l.b16 %v2307
        %v2340 = vunpack.c.l.b16 %v2308
        %v2341 = vunpack.c.l.b16 %v2309
        %v2342 = vunpack.c.l.b16 %v2310
        %v2343 = vunpack.c.l.b16 %v2311
        %v2344 = vunpack.c.l.b16 %v2312
        %v2345 = vunpack.c.l.b16 %v2313
        %v2346 = vunpack.c.l.b16 %v2314
        %v2347 = vunpack.c.l.b16 %v2315
        %v2348 = vpack.c.b16 %v2333, %v2332
        %v2349 = vpack.c.b16 %v2335, %v2334
        %v2350 = vpack.c.b16 %v2337, %v2336
        %v2351 = vpack.c.b16 %v2339, %v2338
        %v2352 = vpack.c.b16 %v2341, %v2340
        %v2353 = vpack.c.b16 %v2343, %v2342
        %v2354 = vpack.c.b16 %v2345, %v2344
        %v2355 = vpack.c.b16 %v2347, %v2346
        %2364 = vmatprep.subr.bf16.mxu0 0
        %2365 = vmatpush1.bf16.msra.mxu0 %v2355
        %2366 = vmatprep.subr.bf16.mxu0 0
        %2367 = vmatpush1.bf16.msra.mxu0 %v2354
        %2368 = vmatprep.subr.bf16.mxu0 0
        %2369 = vmatpush1.bf16.msra.mxu0 %v2353
        %2370 = vmatprep.subr.bf16.mxu0 0
        %2371 = vmatpush1.bf16.msra.mxu0 %v2352
        %2372 = vmatprep.subr.bf16.mxu0 0
        %2373 = vmatpush1.bf16.msra.mxu0 %v2351
        %2374 = vmatprep.subr.bf16.mxu0 0
        %2375 = vmatpush1.bf16.msra.mxu0 %v2350
        %2376 = vmatprep.subr.bf16.mxu0 0
        %2377 = vmatpush1.bf16.msra.mxu0 %v2349
        %2378 = vmatprep.subr.bf16.mxu0 0
        %2379 = vmatpush1.bf16.msra.mxu0 %v2348
        %2380 = vmatprep.subr.bf16.mxu0 0
        %2381 = vmatpush2.bf16.msra.mxu0 0
        %2382 = vmatprep.subr.bf16.mxu0 0
        %2383 = vmatpush2.bf16.msra.mxu0 0
        %2384 = vmatprep.subr.bf16.mxu0 0
        %2385 = vmatpush2.bf16.msra.mxu0 0
        %2386 = vmatprep.subr.bf16.mxu0 0
        %2387 = vmatpush2.bf16.msra.mxu0 0
        %2388 = vmatprep.subr.bf16.mxu0 0
        %2389 = vmatpush2.bf16.msra.mxu0 0
        %2390 = vmatprep.subr.bf16.mxu0 0
        %2391 = vmatpush2.bf16.msra.mxu0 0
        %2392 = vmatprep.subr.bf16.mxu0 0
        %2393 = vmatpush2.bf16.msra.mxu0 0
        %2394 = vmatprep.subr.bf16.mxu0 0
        %2395 = vmatpush2.bf16.msra.mxu0 0
        %2396 = vmatprep.mubr.bf16.mxu0 0
        %2397 = vmatmul.mubr.bf16.gmra.mxu0 %v995
        %v2398 = vpop.f32.mrf.mxu0
        %v2399 = vadd.f32 0.0, %v2398
        %v2400 = vpop.f32.mrf.mxu0
        %v2401 = vpop.f32.mrf.mxu0
        %v2402 = vadd.f32 0.0, %v2401
        %v2403 = vpop.f32.mrf.mxu0
        %2404 = vmatprep.mubr.bf16.mxu0 0
        %2405 = vmatmul.mubr.bf16.gmra.mxu0 %v996
        %v2406 = vpop.f32.mrf.mxu0
        %v2407 = vadd.f32 0.0, %v2406
        %v2408 = vpop.f32.mrf.mxu0
        %v2409 = vpop.f32.mrf.mxu0
        %v2410 = vadd.f32 0.0, %v2409
        %v2411 = vpop.f32.mrf.mxu0
        %2412 = vmatprep.mubr.bf16.mxu0 0
        %2413 = vmatmul.mubr.bf16.gmra.mxu0 %v997
        %v2414 = vpop.f32.mrf.mxu0
        %v2415 = vadd.f32 0.0, %v2414
        %v2416 = vpop.f32.mrf.mxu0
        %v2417 = vpop.f32.mrf.mxu0
        %v2418 = vadd.f32 0.0, %v2417
        %v2419 = vpop.f32.mrf.mxu0
        %2420 = vmatprep.mubr.bf16.mxu0 0
        %2421 = vmatmul.mubr.bf16.gmra.mxu0 %v998
        %v2422 = vpop.f32.mrf.mxu0
        %v2423 = vadd.f32 0.0, %v2422
        %v2424 = vpop.f32.mrf.mxu0
        %v2425 = vpop.f32.mrf.mxu0
        %v2426 = vadd.f32 0.0, %v2425
        %v2427 = vpop.f32.mrf.mxu0
        %2428 = vmatprep.mubr.bf16.mxu0 0
        %2429 = vmatmul.mubr.bf16.gmra.mxu0 %v999
        %v2430 = vpop.f32.mrf.mxu0
        %v2431 = vadd.f32 0.0, %v2430
        %v2432 = vpop.f32.mrf.mxu0
        %v2433 = vpop.f32.mrf.mxu0
        %v2434 = vadd.f32 0.0, %v2433
        %v2435 = vpop.f32.mrf.mxu0
        %2436 = vmatprep.mubr.bf16.mxu0 0
        %2437 = vmatmul.mubr.bf16.gmra.mxu0 %v1000
        %v2438 = vpop.f32.mrf.mxu0
        %v2439 = vadd.f32 0.0, %v2438
        %v2440 = vpop.f32.mrf.mxu0
        %v2441 = vpop.f32.mrf.mxu0
        %v2442 = vadd.f32 0.0, %v2441
        %v2443 = vpop.f32.mrf.mxu0
        %2444 = vmatprep.mubr.bf16.mxu0 0
        %2445 = vmatmul.mubr.bf16.gmra.mxu0 %v1001
        %v2446 = vpop.f32.mrf.mxu0
        %v2447 = vadd.f32 0.0, %v2446
        %v2448 = vpop.f32.mrf.mxu0
        %v2449 = vpop.f32.mrf.mxu0
        %v2450 = vadd.f32 0.0, %v2449
        %v2451 = vpop.f32.mrf.mxu0
        %2452 = vmatprep.mubr.bf16.mxu0 0
        %2453 = vmatmul.mubr.bf16.gmra.mxu0 %v1002
        %v2454 = vpop.f32.mrf.mxu0
        %v2455 = vadd.f32 0.0, %v2454
        %v2456 = vpop.f32.mrf.mxu0
        %v2457 = vpop.f32.mrf.mxu0
        %v2458 = vadd.f32 0.0, %v2457
        %v2459 = vpop.f32.mrf.mxu0
        %2460 = vdwg.mxu0
        %v2461 = vpack.c.bf16 %v2402, %v2399
        %v2462 = vpack.c.bf16 %v2410, %v2407
        %v2463 = vpack.c.bf16 %v2418, %v2415
        %v2464 = vpack.c.bf16 %v2426, %v2423
        %v2465 = vpack.c.bf16 %v2434, %v2431
        %v2466 = vpack.c.bf16 %v2442, %v2439
        %v2467 = vpack.c.bf16 %v2450, %v2447
        %v2468 = vpack.c.bf16 %v2458, %v2455
        %v2477 = vunpack.c.l.b16 %v2461
        %v2478 = vunpack.c.h.b16 %v2461
        %v2479 = vunpack.c.l.b16 %v2462
        %v2480 = vunpack.c.h.b16 %v2462
        %v2481 = vunpack.c.l.b16 %v2463
        %v2482 = vunpack.c.h.b16 %v2463
        %v2483 = vunpack.c.l.b16 %v2464
        %v2484 = vunpack.c.h.b16 %v2464
        %v2485 = vunpack.c.l.b16 %v2465
        %v2486 = vunpack.c.h.b16 %v2465
        %v2487 = vunpack.c.l.b16 %v2466
        %v2488 = vunpack.c.h.b16 %v2466
        %v2489 = vunpack.c.l.b16 %v2467
        %v2490 = vunpack.c.h.b16 %v2467
        %v2491 = vunpack.c.l.b16 %v2468
        %v2492 = vunpack.c.h.b16 %v2468
        %v2493 = vpack.c.b16 %v2477, %v2477
        %v2494 = vpack.c.b16 %v2478, %v2478
        %v2495 = vpack.c.b16 %v2479, %v2479
        %v2496 = vpack.c.b16 %v2480, %v2480
        %v2497 = vpack.c.b16 %v2481, %v2481
        %v2498 = vpack.c.b16 %v2482, %v2482
        %v2499 = vpack.c.b16 %v2483, %v2483
        %v2500 = vpack.c.b16 %v2484, %v2484
        %v2501 = vpack.c.b16 %v2485, %v2485
        %v2502 = vpack.c.b16 %v2486, %v2486
        %v2503 = vpack.c.b16 %v2487, %v2487
        %v2504 = vpack.c.b16 %v2488, %v2488
        %v2505 = vpack.c.b16 %v2489, %v2489
        %v2506 = vpack.c.b16 %v2490, %v2490
        %v2507 = vpack.c.b16 %v2491, %v2491
        %v2508 = vpack.c.b16 %v2492, %v2492
        %s2525 = scalar_lea.vmem %s535, 192 [#allocation13]
        %2526 = vst [vmem:[%s2525] sm:$0xf] %v2493
        %2527 = vst [vmem:[%s2525 + $0x4] sm:$0xf] %v2494
        %2528 = vst [vmem:[%s2525 + $0x8] sm:$0xf] %v2495
        %2529 = vst [vmem:[%s2525 + $0xc] sm:$0xf] %v2496
        %2530 = vst [vmem:[%s2525 + $0x10] sm:$0xf] %v2497
        %2531 = vst [vmem:[%s2525 + $0x14] sm:$0xf] %v2498
        %2532 = vst [vmem:[%s2525 + $0x18] sm:$0xf] %v2499
        %2533 = vst [vmem:[%s2525 + $0x1c] sm:$0xf] %v2500
        %2534 = vst [vmem:[%s2525 + $0x20] sm:$0xf] %v2501
        %2535 = vst [vmem:[%s2525 + $0x24] sm:$0xf] %v2502
        %2536 = vst [vmem:[%s2525 + $0x28] sm:$0xf] %v2503
        %2537 = vst [vmem:[%s2525 + $0x2c] sm:$0xf] %v2504
        %2538 = vst [vmem:[%s2525 + $0x30] sm:$0xf] %v2505
        %2539 = vst [vmem:[%s2525 + $0x34] sm:$0xf] %v2506
        %2540 = vst [vmem:[%s2525 + $0x38] sm:$0xf] %v2507
        %2541 = vst [vmem:[%s2525 + $0x3c] sm:$0xf] %v2508
        %s2542 = sand.u32 %s257, 1
        %s2543 = scalar_lea.sflag [#allocation4], %s2542
        %s2544 = sand.u32 %s257, 1
        %s2545 = smul.addr %s2544, 256
        %s2546 = scalar_lea.vmem [#allocation13], %s2545
        %s2547 = sand.u32 %s39, 1
        %s2548 = scalar_lea.sflag [#allocation15], %s2547
        %s2549 = sand.u32 %s285, 1
        %s2550 = smul.addr %s2549, 64
        %s2551 = scalar_lea.vmem [#allocation14], %s2550
        %s2552 = sand.u32 %s39, 1
        %s2553 = scalar_lea.sflag [#allocation15], %s2552
        %s2554 = sand.u32 %s313, 1
        %s2555 = smul.addr %s2554, 64
        %s2556 = scalar_lea.vmem [#allocation16], %s2555
        %s2557 = sand.u32 %s341, 1
        %s2558 = scalar_lea.sflag [#allocation18], %s2557
        %s2559 = sand.u32 %s341, 1
        %s2560 = smul.addr %s2559, 64
        %s2561 = scalar_lea.vmem [#allocation17], %s2560
        // Predicated region
        $region81: #{tpu_custom_call.1} parent=55 // pred_check
          %p2562 = pneg %p267
        $region82: #{tpu_custom_call.1} parent=55 // pred_check_branch
          %2564 = sbr.rel (%p2562) target = $region84
        $region83: #{tpu_custom_call.1} parent=55 // pred_region
          %s2565 = smul.u32 16, %s44
          %s2567 = ssub.s32 4096, 4096
          %2568 = vsyncadd %s2543, %s2567
          %s2569 = smul.addr %s43, 64
          %s2570 = sadd.s32 %s2565, %s2569
          %s2571 = smul.addr %s2570, 64
          %s2572 = scalar_lea.hbm %s9, %s2571
          %s2573 = sshll.u32 %s2546, 4
          %s2574 = int_to_ptr.vmem [resolvable:$true] %s2573
          %2579 = dma.vmem_to_hbm [thread:$0]  %s2574, 4096, %s2572, %s2543, 64, 64, 4
        $region84: #{tpu_custom_call.1} parent=55 // pred_fallthru
          _
        // Predicated region
        $region85: #{tpu_custom_call.1} parent=55 // pred_check
          %p2580 = pneg %p295
        $region86: #{tpu_custom_call.1} parent=55 // pred_check_branch
          %2582 = sbr.rel (%p2580) target = $region88
        $region87: #{tpu_custom_call.1} parent=55 // pred_region
          %s2583 = smul.u32 16, %s44
          %s2585 = ssub.s32 1024, 1024
          %2586 = vsyncadd %s2548, %s2585
          %s2587 = smul.addr %s43, 16
          %s2588 = sadd.s32 %s2583, %s2587
          %s2589 = smul.addr %s2588, 64
          %s2590 = scalar_lea.hbm %s10, %s2589
          %s2591 = sshll.u32 %s2551, 4
          %s2592 = int_to_ptr.vmem [resolvable:$true] %s2591
          %2597 = dma.vmem_to_hbm [thread:$0]  %s2592, 1024, %s2590, %s2548, 64, 64, 4
        $region88: #{tpu_custom_call.1} parent=55 // pred_fallthru
          _
        // Predicated region
        $region89: #{tpu_custom_call.1} parent=55 // pred_check
          %p2598 = pneg %p323
        $region90: #{tpu_custom_call.1} parent=55 // pred_check_branch
          %2600 = sbr.rel (%p2598) target = $region92
        $region91: #{tpu_custom_call.1} parent=55 // pred_region
          %s2601 = smul.u32 16, %s44
          %s2603 = ssub.s32 1024, 1024
          %2604 = vsyncadd %s2553, %s2603
          %s2605 = smul.addr %s43, 16
          %s2606 = sadd.s32 %s2601, %s2605
          %s2607 = smul.addr %s2606, 64
          %s2608 = scalar_lea.hbm %s11, %s2607
          %s2609 = sshll.u32 %s2556, 4
          %s2610 = int_to_ptr.vmem [resolvable:$true] %s2609
          %2615 = dma.vmem_to_hbm [thread:$0]  %s2610, 1024, %s2608, %s2553, 64, 64, 4
        $region92: #{tpu_custom_call.1} parent=55 // pred_fallthru
          _
        // Predicated region
        $region93: #{tpu_custom_call.1} parent=55 // pred_check
          %p2616 = pneg %p351
        $region94: #{tpu_custom_call.1} parent=55 // pred_check_branch
          %2618 = sbr.rel (%p2616) target = $region96
        $region95: #{tpu_custom_call.1} parent=55 // pred_region
          %s2619 = smul.u32 16, %s44
          %s2621 = ssub.s32 1024, 1024
          %2622 = vsyncadd %s2558, %s2621
          %s2623 = smul.addr %s43, 16
          %s2624 = sadd.s32 %s2619, %s2623
          %s2625 = smul.addr %s2624, 64
          %s2626 = scalar_lea.hbm %s12, %s2625
          %s2627 = sshll.u32 %s2561, 4
          %s2628 = int_to_ptr.vmem [resolvable:$true] %s2627
          %2633 = dma.vmem_to_hbm [thread:$0]  %s2628, 1024, %s2626, %s2558, 64, 64, 4
        $region96: #{tpu_custom_call.1} parent=55 // pred_fallthru
          _
      $region56: #{tpu_custom_call.1} parent=5 // pred_fallthru
        _
      %p2634 = scmp.le.s32.totalorder 2, %s34
      // Predicated region
      $region97: #{tpu_custom_call.1} parent=5 // pred_check
        %p2635 = pneg %p2634
      $region98: #{tpu_custom_call.1} parent=5 // pred_check_branch
        %2637 = sbr.rel (%p2635) target = $region100
      $region99: #{tpu_custom_call.1} parent=5 // pred_region
        %s2638 = ssub.s32 %s34, 2
        // Predicated region
        $region101: #{tpu_custom_call.1} parent=99 // pred_check
          %p2639 = pneg %p273
        $region102: #{tpu_custom_call.1} parent=99 // pred_check_branch
          %2641 = sbr.rel (%p2639) target = $region104
        $region103: #{tpu_custom_call.1} parent=99 // pred_region
          %s2642 = sand.u32 %s258, 1
          %s2643 = scalar_lea.sflag [#allocation4], %s2642
          %s2644 = sand.u32 %s258, 1
          %s2645 = smul.addr %s2644, 256
          %s2646 = scalar_lea.vmem [#allocation13], %s2645
          %2647 = dma.done %s2643, 4096
        $region104: #{tpu_custom_call.1} parent=99 // pred_fallthru
          _
        // Predicated region
        $region105: #{tpu_custom_call.1} parent=99 // pred_check
          %p2648 = pneg %p301
        $region106: #{tpu_custom_call.1} parent=99 // pred_check_branch
          %2650 = sbr.rel (%p2648) target = $region108
        $region107: #{tpu_custom_call.1} parent=99 // pred_region
          %s2651 = sand.u32 %s40, 1
          %s2652 = scalar_lea.sflag [#allocation15], %s2651
          %s2653 = sand.u32 %s286, 1
          %s2654 = smul.addr %s2653, 64
          %s2655 = scalar_lea.vmem [#allocation14], %s2654
          %2656 = dma.done %s2652, 1024
        $region108: #{tpu_custom_call.1} parent=99 // pred_fallthru
          _
        // Predicated region
        $region109: #{tpu_custom_call.1} parent=99 // pred_check
          %p2657 = pneg %p329
        $region110: #{tpu_custom_call.1} parent=99 // pred_check_branch
          %2659 = sbr.rel (%p2657) target = $region112
        $region111: #{tpu_custom_call.1} parent=99 // pred_region
          %s2660 = sand.u32 %s40, 1
          %s2661 = scalar_lea.sflag [#allocation15], %s2660
          %s2662 = sand.u32 %s314, 1
          %s2663 = smul.addr %s2662, 64
          %s2664 = scalar_lea.vmem [#allocation16], %s2663
          %2665 = dma.done %s2661, 1024
        $region112: #{tpu_custom_call.1} parent=99 // pred_fallthru
          _
        // Predicated region
        $region113: #{tpu_custom_call.1} parent=99 // pred_check
          %p2666 = pneg %p357
        $region114: #{tpu_custom_call.1} parent=99 // pred_check_branch
          %2668 = sbr.rel (%p2666) target = $region116
        $region115: #{tpu_custom_call.1} parent=99 // pred_region
          %s2669 = sand.u32 %s342, 1
          %s2670 = scalar_lea.sflag [#allocation18], %s2669
          %s2671 = sand.u32 %s342, 1
          %s2672 = smul.addr %s2671, 64
          %s2673 = scalar_lea.vmem [#allocation17], %s2672
          %2674 = dma.done %s2670, 1024
        $region116: #{tpu_custom_call.1} parent=99 // pred_fallthru
          _
      $region100: #{tpu_custom_call.1} parent=5 // pred_fallthru
        _
    $region6: #{tpu_custom_call.1} parent=1 // loop_footer
      %s38 = sadd.s32 1, %s34
    $region7: #{tpu_custom_call.1} parent=1 // loop_footer_branch
      %33 = sbr.rel target = $region3
    $region8: #{tpu_custom_call.1} parent=1 // loop_exit
      _
    %2675 = vsyncpa [#allocation3], 1
    %s2676 = scalar_lea.sflag [#allocation3], 1
    %2677 = vsyncpa %s2676, 1
    %2678 = vsyncpa [#allocation6], 1
    %2679 = vsyncpa [#allocation9], 1
    %2680 = vsyncpa [#allocation12], 1
    %2681 = vsyncpa [#allocation4], 1
    %s2682 = scalar_lea.sflag [#allocation4], 1
    %2683 = vsyncpa %s2682, 1
    %2684 = vsyncpa [#allocation15], 1
    %s2685 = scalar_lea.sflag [#allocation15], 1
    %2686 = vsyncpa %s2685, 1
    %2687 = vsyncpa [#allocation18], 1
    %s2688 = scalar_lea.sflag [#allocation18], 1
    %2689 = vsyncpa %s2688, 1

</llo_original>
